<compile_context>
chip_gen: v7x
topology: tpu7x:2x2x1
jax: 0.10.0
libtpu: 0.0.40
codegen_flags: <defaults>
</compile_context>

<pallas_src>
import jax
import jax.numpy as jnp
import numpy as np
from jax.experimental import pallas as pl
from jax.experimental.pallas import tpu as pltpu


# ---------------------------------------------------------------------------
# Small static helpers (all plain Python, evaluated at trace time).
# ---------------------------------------------------------------------------
def _largest_divisor_leq(n, cap):
    cap = max(1, min(n, cap))
    for d in range(cap, 0, -1):
        if n % d == 0:
            return d
    return 1


def _pick_batch_block(n, l_out):
    # Keep NB * L_out around ~8K f32 elements (~8 vregs per FMA accumulator)
    # so accumulators stay register-resident; cap NB at 16.
    cap = max(1, (8 * 1024) // max(l_out, 1))
    return _largest_divisor_leq(n, min(cap, 16))


def _channel_group(nb, l_out, cout):
    # How many output channels to accumulate per pass (bounds live vregs).
    vregs = max(1, -(-(nb * l_out) // 1024))
    if vregs <= 4:
        g = 4
    elif vregs <= 8:
        g = 2
    else:
        g = 1
    return max(1, min(g, cout))


def _compiler_params(block_bytes, scratch_bytes=0):
    # Size the VMEM request to the real need (double-buffered blocks + scratch)
    # with headroom; cap well below v7x's 64 MiB physical VMEM per TensorCore.
    need = 2 * block_bytes + scratch_bytes
    limit = int(min(48 * 1024 * 1024, max(16 * 1024 * 1024, 2 * need)))
    return pltpu.CompilerParams(
        dimension_semantics=("parallel",),
        vmem_limit_bytes=limit,
    )


# ---------------------------------------------------------------------------
# In-kernel helpers.
# ---------------------------------------------------------------------------
def _direct_conv_fma(window, w_ref, taps, cout, group, nb, l_out):
    """Direct convolution as broadcast VPU FMAs (no im2col, no MXU).

    window(row, shift) -> (nb, l_out) f32 slice of the (padded) input.
    w_ref: flat 1-D SMEM ref, layout w[co * len(taps) + j] for taps[j].
    Returns a list of `cout` f32 arrays of shape (nb, l_out).
    """
    n_taps = len(taps)
    outs = []
    for co0 in range(0, cout, group):
        cos = list(range(co0, min(co0 + group, cout)))
        accs = [jnp.zeros((nb, l_out), jnp.float32) for _ in cos]
        for j, (row, shift) in enumerate(taps):
            win = window(row, shift)
            for g, co in enumerate(cos):
                accs[g] = accs[g] + w_ref[co * n_taps + j] * win
        outs.extend(accs)
    return outs


def _store_conv_out_and_stats(acc_list, y_ref, st_ref, nb, l_out):
    """Single lane-dense store of the conv result + packed partial BN stats."""
    y = jnp.concatenate([a[:, None, :] for a in acc_list], axis=1)  # (nb,C,l)
    y_ref[...] = y.astype(y_ref.dtype)
    cnt = float(nb * l_out)
    s = jnp.sum(y, axis=(0, 2))                                     # (C,)
    mean = s * (1.0 / cnt)
    m2 = jnp.sum(jnp.square(y - mean[None, :, None]), axis=(0, 2))  # (C,)
    st_ref[0, 0] = jnp.concatenate([s, m2])                         # (2C,)


# ---------------------------------------------------------------------------
# Kernel 1: strided conv0 (polyphase, stride-1 form) + partial BN0 stats.
# ---------------------------------------------------------------------------
def _make_conv0_kernel(*, nb, cin, s, k, l0, group):
    # True tap t on input channel ci maps to polyphase row ci*S + (t % S) with
    # shift t // S.  Weight flat layout matches w0.reshape(-1).
    taps = tuple((ci * s + t % s, t // s) for ci in range(cin) for t in range(k))
    cout = cin

    def kernel(xph_ref, w_ref, y_ref, st_ref):
        window = lambda row, shift: xph_ref[:, row, shift:shift + l0]
        accs = _direct_conv_fma(window, w_ref, taps, cout, group, nb, l0)
        _store_conv_out_and_stats(accs, y_ref, st_ref, nb, l0)

    return kernel


# ---------------------------------------------------------------------------
# Kernel 2: BN0 apply + ReLU + 'same' pad (VMEM scratch) + conv1 (VPU FMAs)
#           + partial BN1 stats.
# ---------------------------------------------------------------------------
def _make_conv1_kernel(*, nb, cin, cout, k, l0, pad_l, pad_r, off, apply_bn0,
                       group):
    taps = tuple((ci, t) for ci in range(cin) for t in range(k))

    def kernel(*refs):
        if apply_bn0:
            h_ref, sc_ref, sh_ref, w_ref, y_ref, st_ref, hp_ref = refs
        else:
            h_ref, w_ref, y_ref, st_ref, hp_ref = refs

        h = h_ref[...].astype(jnp.float32)                      # (nb, cin, l0)
        if apply_bn0:
            h = jnp.maximum(h * sc_ref[...][None] + sh_ref[...][None], 0.0)
        # TODO(synk): dropout treated as identity (inference-mode forward).

        # 'same' padding via a persistent VMEM scratch.  The interior store
        # starts at a 128-lane-aligned offset; pad columns are re-zeroed every
        # step (cheap, and a program_id==0 guard would be unsafe on megacore).
        hp_ref[:, :, off:off + l0] = h
        if pad_l:
            hp_ref[:, :, off - pad_l:off] = jnp.zeros((nb, cin, pad_l),
                                                      jnp.float32)
        if pad_r:
            hp_ref[:, :, off + l0:off + l0 + pad_r] = jnp.zeros(
                (nb, cin, pad_r), jnp.float32)

        base = off - pad_l
        window = lambda row, shift: hp_ref[:, row,
                                           base + shift:base + shift + l0]
        accs = _direct_conv_fma(window, w_ref, taps, cout, group, nb, l0)
        _store_conv_out_and_stats(accs, y_ref, st_ref, nb, l0)

    return kernel


# ---------------------------------------------------------------------------
# Kernel 3: BN1 apply + ReLU (output already in NCL layout, f32).
# ---------------------------------------------------------------------------
def _bn_relu_kernel(y_ref, sc_ref, sh_ref, o_ref):
    y = y_ref[...].astype(jnp.float32)
    o_ref[...] = jnp.maximum(y * sc_ref[...][None] + sh_ref[...][None],
                             0.0).astype(o_ref.dtype)


# ---------------------------------------------------------------------------
# Wrapper glue: BN finalization from per-step (sum, M2) partials (Chan combine).
# ---------------------------------------------------------------------------
def _finalize_bn(stats, gamma, beta, cnt_step, cnt_total, eps):
    c = gamma.shape[0]
    s = stats[:, 0, :c]                         # (steps, C) per-step sums
    m2 = stats[:, 0, c:]                        # (steps, C) per-step M2
    mean_step = s / cnt_step
    mean_g = jnp.sum(s, axis=0) / cnt_total
    m2_g = jnp.sum(m2, axis=0) + cnt_step * jnp.sum(
        jnp.square(mean_step - mean_g[None, :]), axis=0)
    var = m2_g / cnt_total                      # biased (training-mode) variance
    scale = gamma.astype(jnp.float32) * jax.lax.rsqrt(var + eps)
    shift = beta.astype(jnp.float32) - mean_g * scale
    return scale.reshape(c, 1), shift.reshape(c, 1)


# ---------------------------------------------------------------------------
# Public forward.
# ---------------------------------------------------------------------------
def conv_block_forward(x, w0, g0, b0, w1, g1, b1, *,
                       kernel_size, stride, has_stride_conv=True, eps=1e-5):
    """x: (N, C_in, L) float32 (PyTorch NCL).  Returns (N, C_out, L_out) f32."""
    N, Cin, L = x.shape
    K = kernel_size
    S = stride if has_stride_conv else 1
    kpad = K - S if has_stride_conv else 0
    Cout = w1.shape[0]
    x = x.astype(jnp.float32)

    # First padding (matches the module's forward exactly).
    p = (S - L % S) % S + kpad
    L0 = (L + p - K) // S + 1 if has_stride_conv else L

    NB = _pick_batch_block(N, L0)
    n_steps = N // NB
    inter_dtype = jnp.bfloat16            # HBM round-trip dtype for y0 / y1

    blk3 = lambda c, l: pl.BlockSpec((NB, c, l), lambda i: (i, 0, 0))
    rep2 = lambda r, c: pl.BlockSpec((r, c), lambda i: (0, 0))
    smem_full = pl.BlockSpec(memory_space=pltpu.MemorySpace.SMEM)

    if has_stride_conv:
        xp = jnp.pad(x, ((0, 0), (0, 0), (p // 2, p - p // 2)))     # (N,Cin,Lp)
        Lp = L + p
        Kq = -(-K // S)                                             # ceil(K/S)
        Lq = L0 + Kq - 1
        # Polyphase split (1x data movement, no K-fold im2col expansion):
        #   xph[n, ci*S + r, m] = xp[n, ci, S*m + r]
        xp2 = jnp.pad(xp, ((0, 0), (0, 0), (0, S * Lq - Lp)))
        xph = (xp2.reshape(N, Cin, Lq, S)
                  .transpose(0, 1, 3, 2)
                  .reshape(N, Cin * S, Lq))
        w0flat = w0.astype(jnp.float32).reshape(-1)                 # (Cin*Cin*K,)

        group0 = _channel_group(NB, L0, Cin)
        k0 = _make_conv0_kernel(nb=NB, cin=Cin, s=S, k=K, l0=L0, group=group0)
        blk_bytes0 = NB * Cin * S * Lq * 4 + NB * Cin * L0 * 2
        y0, st0 = pl.pallas_call(
            k0,
            grid=(n_steps,),
            in_specs=[blk3(Cin * S, Lq), smem_full],
            out_specs=[blk3(Cin, L0),
                       pl.BlockSpec((1, 1, 2 * Cin), lambda i: (i, 0, 0))],
            out_shape=[jax.ShapeDtypeStruct((N, Cin, L0), inter_dtype),
                       jax.ShapeDtypeStruct((n_steps, 1, 2 * Cin), jnp.float32)],
            compiler_params=_compiler_params(blk_bytes0),
        )(xph, w0flat)
        scale0, shift0 = _finalize_bn(st0, g0, b0, float(NB * L0),
                                      float(N * L0), eps)
        h = y0
    else:
        h = x                                   # conv0/bn0/relu0 are Identity.
        scale0 = shift0 = None

    pad_l = (K - 1) // 2
    pad_r = K - 1 - pad_l
    off = 128 if pad_l else 0                   # 128-lane-aligned interior store
    w1flat = w1.astype(jnp.float32).reshape(-1)                     # (Cout*Cin*K,)

    group1 = _channel_group(NB, L0, Cout)
    k1 = _make_conv1_kernel(nb=NB, cin=Cin, cout=Cout, k=K, l0=L0,
                            pad_l=pad_l, pad_r=pad_r, off=off,
                            apply_bn0=has_stride_conv, group=group1)
    scratch_bytes = NB * Cin * (off + L0 + pad_r) * 4
    blk_bytes1 = NB * Cin * L0 * h.dtype.itemsize + NB * Cout * L0 * 2

    in_specs1 = [blk3(Cin, L0)]
    args1 = [h]
    if has_stride_conv:
        in_specs1 += [rep2(Cin, 1), rep2(Cin, 1)]
        args1 += [scale0, shift0]
    in_specs1 += [smem_full]
    args1 += [w1flat]

    y1, st1 = pl.pallas_call(
        k1,
        grid=(n_steps,),
        in_specs=in_specs1,
        out_specs=[blk3(Cout, L0),
                   pl.BlockSpec((1, 1, 2 * Cout), lambda i: (i, 0, 0))],
        out_shape=[jax.ShapeDtypeStruct((N, Cout, L0), inter_dtype),
                   jax.ShapeDtypeStruct((n_steps, 1, 2 * Cout), jnp.float32)],
        scratch_shapes=[pltpu.VMEM((NB, Cin, off + L0 + pad_r), jnp.float32)],
        compiler_params=_compiler_params(blk_bytes1, scratch_bytes),
    )(*args1)

    scale1, shift1 = _finalize_bn(st1, g1, b1, float(NB * L0), float(N * L0),
                                  eps)

    # TODO(synk): in a full PhaseNet pipeline this BN1+ReLU pass should be
    # fused into the next block's kernel; standalone it must stay a separate
    # pass because training-mode BN needs global batch stats of y1 first.
    blk_bytes2 = NB * Cout * L0 * (2 + 4)
    out = pl.pallas_call(
        _bn_relu_kernel,
        grid=(n_steps,),
        in_specs=[blk3(Cout, L0), rep2(Cout, 1), rep2(Cout, 1)],
        out_specs=blk3(Cout, L0),
        out_shape=jax.ShapeDtypeStruct((N, Cout, L0), jnp.float32),
        compiler_params=_compiler_params(blk_bytes2),
    )(y1, scale1, shift1)

    return out                                             # (N, Cout, L0) NCL


# ---------------------------------------------------------------------------
# Pure-JAX f32 reference with identical semantics (for verification).
# ---------------------------------------------------------------------------
def ref_forward(x, w0, g0, b0, w1, g1, b1, *,
                kernel_size, stride, has_stride_conv=True, eps=1e-5):
    K = kernel_size
    S = stride if has_stride_conv else 1
    kpad = K - S if has_stride_conv else 0
    L = x.shape[-1]
    p = (S - L % S) % S + kpad
    y = jnp.pad(x, ((0, 0), (0, 0), (p // 2, p - p // 2)))
    dn = ('NCH', 'OIH', 'NCH')
    if has_stride_conv:
        y = jax.lax.conv_general_dilated(y, w0, (S,), 'VALID',
                                         dimension_numbers=dn,
                                         precision=jax.lax.Precision.HIGHEST)
        m = y.mean(axis=(0, 2), keepdims=True)
        v = ((y - m) ** 2).mean(axis=(0, 2), keepdims=True)
        y = (y - m) * jax.lax.rsqrt(v + eps) * g0.reshape(1, -1, 1) \
            + b0.reshape(1, -1, 1)
        y = jnp.maximum(y, 0.0)
    pl_, pr_ = (K - 1) // 2, K - 1 - (K - 1) // 2
    y = jnp.pad(y, ((0, 0), (0, 0), (pl_, pr_)))
    z = jax.lax.conv_general_dilated(y, w1, (1,), 'VALID',
                                     dimension_numbers=dn,
                                     precision=jax.lax.Precision.HIGHEST)
    m = z.mean(axis=(0, 2), keepdims=True)
    v = ((z - m) ** 2).mean(axis=(0, 2), keepdims=True)
    z = (z - m) * jax.lax.rsqrt(v + eps) * g1.reshape(1, -1, 1) \
        + b1.reshape(1, -1, 1)
    return jnp.maximum(z, 0.0)


if __name__ == "__main__":
    # PhaseNet-like config at small shapes: in=4, out=8, kernel=7, stride=4.
    N, Cin, Cout, L, K, S = 2, 4, 8, 64, 7, 4

    key = jax.random.PRNGKey(0)
    ks = jax.random.split(key, 7)
    x  = jax.random.normal(ks[0], (N, Cin, L), jnp.float32)
    w0 = jax.random.normal(ks[1], (Cin, Cin, K), jnp.float32) * 0.1   # conv0 w
    g0 = 1.0 + 0.1 * jax.random.normal(ks[2], (Cin,), jnp.float32)    # bn0 gamma
    b0 = 0.1 * jax.random.normal(ks[3], (Cin,), jnp.float32)          # bn0 beta
    w1 = jax.random.normal(ks[4], (Cout, Cin, K), jnp.float32) * 0.1  # conv1 w
    g1 = 1.0 + 0.1 * jax.random.normal(ks[5], (Cout,), jnp.float32)   # bn1 gamma
    b1 = 0.1 * jax.random.normal(ks[6], (Cout,), jnp.float32)         # bn1 beta

    out = conv_block_forward(x, w0, g0, b0, w1, g1, b1,
                             kernel_size=K, stride=S, has_stride_conv=True)
    out = jax.block_until_ready(out)

    p = (S - L % S) % S + (K - S)
    L0 = (L + p - K) // S + 1
    assert out.shape == (N, Cout, L0), out.shape

    # Tolerance covers the bf16 HBM round-trip of the intermediates (the conv
    # FMAs and BN statistics themselves are exact f32).
    ref = ref_forward(x, w0, g0, b0, w1, g1, b1,
                      kernel_size=K, stride=S, has_stride_conv=True)
    np.testing.assert_allclose(np.asarray(out), np.asarray(ref),
                               rtol=2e-2, atol=2e-2)

    # Identity first-stage path (has_stride_conv=False).
    out2 = conv_block_forward(x, w0, g0, b0, w1, g1, b1,
                              kernel_size=K, stride=S, has_stride_conv=False)
    out2 = jax.block_until_ready(out2)
    assert out2.shape == (N, Cout, L), out2.shape
    ref2 = ref_forward(x, w0, g0, b0, w1, g1, b1,
                       kernel_size=K, stride=S, has_stride_conv=False)
    np.testing.assert_allclose(np.asarray(out2), np.asarray(ref2),
                               rtol=2e-2, atol=2e-2)

    print("KERNEL_OK")
</pallas_src>

<mosaic_0001>
module attributes {stable_mosaic.version = 11 : i64} {
  func.func @kernel(%arg0: i32, %arg1: memref<2x16x17xf32, #tpu.memory_space<vmem>>, %arg2: memref<112xf32, #tpu.memory_space<smem>>, %arg3: memref<2x4x16xbf16, #tpu.memory_space<vmem>>, %arg4: memref<1x1x8xf32, #tpu.memory_space<vmem>>) attributes {dimension_semantics = [#tpu.dimension_semantics<parallel>], iteration_bounds = array<i64: 1>, scalar_prefetch = 0 : i64, scratch_operands = 0 : i64, tpu.core_type = #tpu.core_type<tc>, window_params = [{transform_indices = @transform_0, window_bounds = array<i64: 2, 16, 17>}, {transform_indices = @transform_1, window_bounds = array<i64: 112>}, {transform_indices = @transform_2, window_bounds = array<i64: 2, 4, 16>}, {transform_indices = @transform_3, window_bounds = array<i64: 1, 1, 8>}]} {
    %cst = arith.constant 0.000000e+00 : f32
    %0 = vector.broadcast %cst : f32 to vector<2x16xf32>
    %cst_0 = arith.constant 0.000000e+00 : f32
    %1 = vector.broadcast %cst_0 : f32 to vector<2x16xf32>
    %cst_1 = arith.constant 0.000000e+00 : f32
    %2 = vector.broadcast %cst_1 : f32 to vector<2x16xf32>
    %cst_2 = arith.constant 0.000000e+00 : f32
    %3 = vector.broadcast %cst_2 : f32 to vector<2x16xf32>
    %c0 = arith.constant 0 : index
    %c0_3 = arith.constant 0 : index
    %c0_4 = arith.constant 0 : index
    %4 = vector.load %arg1[%c0, %c0_3, %c0_4] : memref<2x16x17xf32, #tpu.memory_space<vmem>>, vector<2x1x16xf32>
    %5 = vector.shape_cast %4 : vector<2x1x16xf32> to vector<2x16xf32>
    %c0_5 = arith.constant 0 : index
    %6 = memref.load %arg2[%c0_5] : memref<112xf32, #tpu.memory_space<smem>>
    %7 = vector.broadcast %6 : f32 to vector<2x16xf32>
    %8 = arith.mulf %7, %5 : vector<2x16xf32>
    %9 = arith.addf %0, %8 : vector<2x16xf32>
    %c28 = arith.constant 28 : index
    %10 = memref.load %arg2[%c28] : memref<112xf32, #tpu.memory_space<smem>>
    %11 = vector.broadcast %10 : f32 to vector<2x16xf32>
    %12 = arith.mulf %11, %5 : vector<2x16xf32>
    %13 = arith.addf %1, %12 : vector<2x16xf32>
    %c56 = arith.constant 56 : index
    %14 = memref.load %arg2[%c56] : memref<112xf32, #tpu.memory_space<smem>>
    %15 = vector.broadcast %14 : f32 to vector<2x16xf32>
    %16 = arith.mulf %15, %5 : vector<2x16xf32>
    %17 = arith.addf %2, %16 : vector<2x16xf32>
    %c84 = arith.constant 84 : index
    %18 = memref.load %arg2[%c84] : memref<112xf32, #tpu.memory_space<smem>>
    %19 = vector.broadcast %18 : f32 to vector<2x16xf32>
    %20 = arith.mulf %19, %5 : vector<2x16xf32>
    %21 = arith.addf %3, %20 : vector<2x16xf32>
    %c0_6 = arith.constant 0 : index
    %c1 = arith.constant 1 : index
    %c0_7 = arith.constant 0 : index
    %22 = vector.load %arg1[%c0_6, %c1, %c0_7] : memref<2x16x17xf32, #tpu.memory_space<vmem>>, vector<2x1x16xf32>
    %23 = vector.shape_cast %22 : vector<2x1x16xf32> to vector<2x16xf32>
    %c1_8 = arith.constant 1 : index
    %24 = memref.load %arg2[%c1_8] : memref<112xf32, #tpu.memory_space<smem>>
    %25 = vector.broadcast %24 : f32 to vector<2x16xf32>
    %26 = arith.mulf %25, %23 : vector<2x16xf32>
    %27 = arith.addf %9, %26 : vector<2x16xf32>
    %c29 = arith.constant 29 : index
    %28 = memref.load %arg2[%c29] : memref<112xf32, #tpu.memory_space<smem>>
    %29 = vector.broadcast %28 : f32 to vector<2x16xf32>
    %30 = arith.mulf %29, %23 : vector<2x16xf32>
    %31 = arith.addf %13, %30 : vector<2x16xf32>
    %c57 = arith.constant 57 : index
    %32 = memref.load %arg2[%c57] : memref<112xf32, #tpu.memory_space<smem>>
    %33 = vector.broadcast %32 : f32 to vector<2x16xf32>
    %34 = arith.mulf %33, %23 : vector<2x16xf32>
    %35 = arith.addf %17, %34 : vector<2x16xf32>
    %c85 = arith.constant 85 : index
    %36 = memref.load %arg2[%c85] : memref<112xf32, #tpu.memory_space<smem>>
    %37 = vector.broadcast %36 : f32 to vector<2x16xf32>
    %38 = arith.mulf %37, %23 : vector<2x16xf32>
    %39 = arith.addf %21, %38 : vector<2x16xf32>
    %c0_9 = arith.constant 0 : index
    %c2 = arith.constant 2 : index
    %c0_10 = arith.constant 0 : index
    %40 = vector.load %arg1[%c0_9, %c2, %c0_10] : memref<2x16x17xf32, #tpu.memory_space<vmem>>, vector<2x1x16xf32>
    %41 = vector.shape_cast %40 : vector<2x1x16xf32> to vector<2x16xf32>
    %c2_11 = arith.constant 2 : index
    %42 = memref.load %arg2[%c2_11] : memref<112xf32, #tpu.memory_space<smem>>
    %43 = vector.broadcast %42 : f32 to vector<2x16xf32>
    %44 = arith.mulf %43, %41 : vector<2x16xf32>
    %45 = arith.addf %27, %44 : vector<2x16xf32>
    %c30 = arith.constant 30 : index
    %46 = memref.load %arg2[%c30] : memref<112xf32, #tpu.memory_space<smem>>
    %47 = vector.broadcast %46 : f32 to vector<2x16xf32>
    %48 = arith.mulf %47, %41 : vector<2x16xf32>
    %49 = arith.addf %31, %48 : vector<2x16xf32>
    %c58 = arith.constant 58 : index
    %50 = memref.load %arg2[%c58] : memref<112xf32, #tpu.memory_space<smem>>
    %51 = vector.broadcast %50 : f32 to vector<2x16xf32>
    %52 = arith.mulf %51, %41 : vector<2x16xf32>
    %53 = arith.addf %35, %52 : vector<2x16xf32>
    %c86 = arith.constant 86 : index
    %54 = memref.load %arg2[%c86] : memref<112xf32, #tpu.memory_space<smem>>
    %55 = vector.broadcast %54 : f32 to vector<2x16xf32>
    %56 = arith.mulf %55, %41 : vector<2x16xf32>
    %57 = arith.addf %39, %56 : vector<2x16xf32>
    %c0_12 = arith.constant 0 : index
    %c3 = arith.constant 3 : index
    %c0_13 = arith.constant 0 : index
    %58 = vector.load %arg1[%c0_12, %c3, %c0_13] : memref<2x16x17xf32, #tpu.memory_space<vmem>>, vector<2x1x16xf32>
    %59 = vector.shape_cast %58 : vector<2x1x16xf32> to vector<2x16xf32>
    %c3_14 = arith.constant 3 : index
    %60 = memref.load %arg2[%c3_14] : memref<112xf32, #tpu.memory_space<smem>>
    %61 = vector.broadcast %60 : f32 to vector<2x16xf32>
    %62 = arith.mulf %61, %59 : vector<2x16xf32>
    %63 = arith.addf %45, %62 : vector<2x16xf32>
    %c31 = arith.constant 31 : index
    %64 = memref.load %arg2[%c31] : memref<112xf32, #tpu.memory_space<smem>>
    %65 = vector.broadcast %64 : f32 to vector<2x16xf32>
    %66 = arith.mulf %65, %59 : vector<2x16xf32>
    %67 = arith.addf %49, %66 : vector<2x16xf32>
    %c59 = arith.constant 59 : index
    %68 = memref.load %arg2[%c59] : memref<112xf32, #tpu.memory_space<smem>>
    %69 = vector.broadcast %68 : f32 to vector<2x16xf32>
    %70 = arith.mulf %69, %59 : vector<2x16xf32>
    %71 = arith.addf %53, %70 : vector<2x16xf32>
    %c87 = arith.constant 87 : index
    %72 = memref.load %arg2[%c87] : memref<112xf32, #tpu.memory_space<smem>>
    %73 = vector.broadcast %72 : f32 to vector<2x16xf32>
    %74 = arith.mulf %73, %59 : vector<2x16xf32>
    %75 = arith.addf %57, %74 : vector<2x16xf32>
    %c0_15 = arith.constant 0 : index
    %c0_16 = arith.constant 0 : index
    %c1_17 = arith.constant 1 : index
    %76 = vector.load %arg1[%c0_15, %c0_16, %c1_17] : memref<2x16x17xf32, #tpu.memory_space<vmem>>, vector<2x1x16xf32>
    %77 = vector.shape_cast %76 : vector<2x1x16xf32> to vector<2x16xf32>
    %c4 = arith.constant 4 : index
    %78 = memref.load %arg2[%c4] : memref<112xf32, #tpu.memory_space<smem>>
    %79 = vector.broadcast %78 : f32 to vector<2x16xf32>
    %80 = arith.mulf %79, %77 : vector<2x16xf32>
    %81 = arith.addf %63, %80 : vector<2x16xf32>
    %c32 = arith.constant 32 : index
    %82 = memref.load %arg2[%c32] : memref<112xf32, #tpu.memory_space<smem>>
    %83 = vector.broadcast %82 : f32 to vector<2x16xf32>
    %84 = arith.mulf %83, %77 : vector<2x16xf32>
    %85 = arith.addf %67, %84 : vector<2x16xf32>
    %c60 = arith.constant 60 : index
    %86 = memref.load %arg2[%c60] : memref<112xf32, #tpu.memory_space<smem>>
    %87 = vector.broadcast %86 : f32 to vector<2x16xf32>
    %88 = arith.mulf %87, %77 : vector<2x16xf32>
    %89 = arith.addf %71, %88 : vector<2x16xf32>
    %c88 = arith.constant 88 : index
    %90 = memref.load %arg2[%c88] : memref<112xf32, #tpu.memory_space<smem>>
    %91 = vector.broadcast %90 : f32 to vector<2x16xf32>
    %92 = arith.mulf %91, %77 : vector<2x16xf32>
    %93 = arith.addf %75, %92 : vector<2x16xf32>
    %c0_18 = arith.constant 0 : index
    %c1_19 = arith.constant 1 : index
    %c1_20 = arith.constant 1 : index
    %94 = vector.load %arg1[%c0_18, %c1_19, %c1_20] : memref<2x16x17xf32, #tpu.memory_space<vmem>>, vector<2x1x16xf32>
    %95 = vector.shape_cast %94 : vector<2x1x16xf32> to vector<2x16xf32>
    %c5 = arith.constant 5 : index
    %96 = memref.load %arg2[%c5] : memref<112xf32, #tpu.memory_space<smem>>
    %97 = vector.broadcast %96 : f32 to vector<2x16xf32>
    %98 = arith.mulf %97, %95 : vector<2x16xf32>
    %99 = arith.addf %81, %98 : vector<2x16xf32>
    %c33 = arith.constant 33 : index
    %100 = memref.load %arg2[%c33] : memref<112xf32, #tpu.memory_space<smem>>
    %101 = vector.broadcast %100 : f32 to vector<2x16xf32>
    %102 = arith.mulf %101, %95 : vector<2x16xf32>
    %103 = arith.addf %85, %102 : vector<2x16xf32>
    %c61 = arith.constant 61 : index
    %104 = memref.load %arg2[%c61] : memref<112xf32, #tpu.memory_space<smem>>
    %105 = vector.broadcast %104 : f32 to vector<2x16xf32>
    %106 = arith.mulf %105, %95 : vector<2x16xf32>
    %107 = arith.addf %89, %106 : vector<2x16xf32>
    %c89 = arith.constant 89 : index
    %108 = memref.load %arg2[%c89] : memref<112xf32, #tpu.memory_space<smem>>
    %109 = vector.broadcast %108 : f32 to vector<2x16xf32>
    %110 = arith.mulf %109, %95 : vector<2x16xf32>
    %111 = arith.addf %93, %110 : vector<2x16xf32>
    %c0_21 = arith.constant 0 : index
    %c2_22 = arith.constant 2 : index
    %c1_23 = arith.constant 1 : index
    %112 = vector.load %arg1[%c0_21, %c2_22, %c1_23] : memref<2x16x17xf32, #tpu.memory_space<vmem>>, vector<2x1x16xf32>
    %113 = vector.shape_cast %112 : vector<2x1x16xf32> to vector<2x16xf32>
    %c6 = arith.constant 6 : index
    %114 = memref.load %arg2[%c6] : memref<112xf32, #tpu.memory_space<smem>>
    %115 = vector.broadcast %114 : f32 to vector<2x16xf32>
    %116 = arith.mulf %115, %113 : vector<2x16xf32>
    %117 = arith.addf %99, %116 : vector<2x16xf32>
    %c34 = arith.constant 34 : index
    %118 = memref.load %arg2[%c34] : memref<112xf32, #tpu.memory_space<smem>>
    %119 = vector.broadcast %118 : f32 to vector<2x16xf32>
    %120 = arith.mulf %119, %113 : vector<2x16xf32>
    %121 = arith.addf %103, %120 : vector<2x16xf32>
    %c62 = arith.constant 62 : index
    %122 = memref.load %arg2[%c62] : memref<112xf32, #tpu.memory_space<smem>>
    %123 = vector.broadcast %122 : f32 to vector<2x16xf32>
    %124 = arith.mulf %123, %113 : vector<2x16xf32>
    %125 = arith.addf %107, %124 : vector<2x16xf32>
    %c90 = arith.constant 90 : index
    %126 = memref.load %arg2[%c90] : memref<112xf32, #tpu.memory_space<smem>>
    %127 = vector.broadcast %126 : f32 to vector<2x16xf32>
    %128 = arith.mulf %127, %113 : vector<2x16xf32>
    %129 = arith.addf %111, %128 : vector<2x16xf32>
    %c0_24 = arith.constant 0 : index
    %c4_25 = arith.constant 4 : index
    %c0_26 = arith.constant 0 : index
    %130 = vector.load %arg1[%c0_24, %c4_25, %c0_26] : memref<2x16x17xf32, #tpu.memory_space<vmem>>, vector<2x1x16xf32>
    %131 = vector.shape_cast %130 : vector<2x1x16xf32> to vector<2x16xf32>
    %c7 = arith.constant 7 : index
    %132 = memref.load %arg2[%c7] : memref<112xf32, #tpu.memory_space<smem>>
    %133 = vector.broadcast %132 : f32 to vector<2x16xf32>
    %134 = arith.mulf %133, %131 : vector<2x16xf32>
    %135 = arith.addf %117, %134 : vector<2x16xf32>
    %c35 = arith.constant 35 : index
    %136 = memref.load %arg2[%c35] : memref<112xf32, #tpu.memory_space<smem>>
    %137 = vector.broadcast %136 : f32 to vector<2x16xf32>
    %138 = arith.mulf %137, %131 : vector<2x16xf32>
    %139 = arith.addf %121, %138 : vector<2x16xf32>
    %c63 = arith.constant 63 : index
    %140 = memref.load %arg2[%c63] : memref<112xf32, #tpu.memory_space<smem>>
    %141 = vector.broadcast %140 : f32 to vector<2x16xf32>
    %142 = arith.mulf %141, %131 : vector<2x16xf32>
    %143 = arith.addf %125, %142 : vector<2x16xf32>
    %c91 = arith.constant 91 : index
    %144 = memref.load %arg2[%c91] : memref<112xf32, #tpu.memory_space<smem>>
    %145 = vector.broadcast %144 : f32 to vector<2x16xf32>
    %146 = arith.mulf %145, %131 : vector<2x16xf32>
    %147 = arith.addf %129, %146 : vector<2x16xf32>
    %c0_27 = arith.constant 0 : index
    %c5_28 = arith.constant 5 : index
    %c0_29 = arith.constant 0 : index
    %148 = vector.load %arg1[%c0_27, %c5_28, %c0_29] : memref<2x16x17xf32, #tpu.memory_space<vmem>>, vector<2x1x16xf32>
    %149 = vector.shape_cast %148 : vector<2x1x16xf32> to vector<2x16xf32>
    %c8 = arith.constant 8 : index
    %150 = memref.load %arg2[%c8] : memref<112xf32, #tpu.memory_space<smem>>
    %151 = vector.broadcast %150 : f32 to vector<2x16xf32>
    %152 = arith.mulf %151, %149 : vector<2x16xf32>
    %153 = arith.addf %135, %152 : vector<2x16xf32>
    %c36 = arith.constant 36 : index
    %154 = memref.load %arg2[%c36] : memref<112xf32, #tpu.memory_space<smem>>
    %155 = vector.broadcast %154 : f32 to vector<2x16xf32>
    %156 = arith.mulf %155, %149 : vector<2x16xf32>
    %157 = arith.addf %139, %156 : vector<2x16xf32>
    %c64 = arith.constant 64 : index
    %158 = memref.load %arg2[%c64] : memref<112xf32, #tpu.memory_space<smem>>
    %159 = vector.broadcast %158 : f32 to vector<2x16xf32>
    %160 = arith.mulf %159, %149 : vector<2x16xf32>
    %161 = arith.addf %143, %160 : vector<2x16xf32>
    %c92 = arith.constant 92 : index
    %162 = memref.load %arg2[%c92] : memref<112xf32, #tpu.memory_space<smem>>
    %163 = vector.broadcast %162 : f32 to vector<2x16xf32>
    %164 = arith.mulf %163, %149 : vector<2x16xf32>
    %165 = arith.addf %147, %164 : vector<2x16xf32>
    %c0_30 = arith.constant 0 : index
    %c6_31 = arith.constant 6 : index
    %c0_32 = arith.constant 0 : index
    %166 = vector.load %arg1[%c0_30, %c6_31, %c0_32] : memref<2x16x17xf32, #tpu.memory_space<vmem>>, vector<2x1x16xf32>
    %167 = vector.shape_cast %166 : vector<2x1x16xf32> to vector<2x16xf32>
    %c9 = arith.constant 9 : index
    %168 = memref.load %arg2[%c9] : memref<112xf32, #tpu.memory_space<smem>>
    %169 = vector.broadcast %168 : f32 to vector<2x16xf32>
    %170 = arith.mulf %169, %167 : vector<2x16xf32>
    %171 = arith.addf %153, %170 : vector<2x16xf32>
    %c37 = arith.constant 37 : index
    %172 = memref.load %arg2[%c37] : memref<112xf32, #tpu.memory_space<smem>>
    %173 = vector.broadcast %172 : f32 to vector<2x16xf32>
    %174 = arith.mulf %173, %167 : vector<2x16xf32>
    %175 = arith.addf %157, %174 : vector<2x16xf32>
    %c65 = arith.constant 65 : index
    %176 = memref.load %arg2[%c65] : memref<112xf32, #tpu.memory_space<smem>>
    %177 = vector.broadcast %176 : f32 to vector<2x16xf32>
    %178 = arith.mulf %177, %167 : vector<2x16xf32>
    %179 = arith.addf %161, %178 : vector<2x16xf32>
    %c93 = arith.constant 93 : index
    %180 = memref.load %arg2[%c93] : memref<112xf32, #tpu.memory_space<smem>>
    %181 = vector.broadcast %180 : f32 to vector<2x16xf32>
    %182 = arith.mulf %181, %167 : vector<2x16xf32>
    %183 = arith.addf %165, %182 : vector<2x16xf32>
    %c0_33 = arith.constant 0 : index
    %c7_34 = arith.constant 7 : index
    %c0_35 = arith.constant 0 : index
    %184 = vector.load %arg1[%c0_33, %c7_34, %c0_35] : memref<2x16x17xf32, #tpu.memory_space<vmem>>, vector<2x1x16xf32>
    %185 = vector.shape_cast %184 : vector<2x1x16xf32> to vector<2x16xf32>
    %c10 = arith.constant 10 : index
    %186 = memref.load %arg2[%c10] : memref<112xf32, #tpu.memory_space<smem>>
    %187 = vector.broadcast %186 : f32 to vector<2x16xf32>
    %188 = arith.mulf %187, %185 : vector<2x16xf32>
    %189 = arith.addf %171, %188 : vector<2x16xf32>
    %c38 = arith.constant 38 : index
    %190 = memref.load %arg2[%c38] : memref<112xf32, #tpu.memory_space<smem>>
    %191 = vector.broadcast %190 : f32 to vector<2x16xf32>
    %192 = arith.mulf %191, %185 : vector<2x16xf32>
    %193 = arith.addf %175, %192 : vector<2x16xf32>
    %c66 = arith.constant 66 : index
    %194 = memref.load %arg2[%c66] : memref<112xf32, #tpu.memory_space<smem>>
    %195 = vector.broadcast %194 : f32 to vector<2x16xf32>
    %196 = arith.mulf %195, %185 : vector<2x16xf32>
    %197 = arith.addf %179, %196 : vector<2x16xf32>
    %c94 = arith.constant 94 : index
    %198 = memref.load %arg2[%c94] : memref<112xf32, #tpu.memory_space<smem>>
    %199 = vector.broadcast %198 : f32 to vector<2x16xf32>
    %200 = arith.mulf %199, %185 : vector<2x16xf32>
    %201 = arith.addf %183, %200 : vector<2x16xf32>
    %c0_36 = arith.constant 0 : index
    %c4_37 = arith.constant 4 : index
    %c1_38 = arith.constant 1 : index
    %202 = vector.load %arg1[%c0_36, %c4_37, %c1_38] : memref<2x16x17xf32, #tpu.memory_space<vmem>>, vector<2x1x16xf32>
    %203 = vector.shape_cast %202 : vector<2x1x16xf32> to vector<2x16xf32>
    %c11 = arith.constant 11 : index
    %204 = memref.load %arg2[%c11] : memref<112xf32, #tpu.memory_space<smem>>
    %205 = vector.broadcast %204 : f32 to vector<2x16xf32>
    %206 = arith.mulf %205, %203 : vector<2x16xf32>
    %207 = arith.addf %189, %206 : vector<2x16xf32>
    %c39 = arith.constant 39 : index
    %208 = memref.load %arg2[%c39] : memref<112xf32, #tpu.memory_space<smem>>
    %209 = vector.broadcast %208 : f32 to vector<2x16xf32>
    %210 = arith.mulf %209, %203 : vector<2x16xf32>
    %211 = arith.addf %193, %210 : vector<2x16xf32>
    %c67 = arith.constant 67 : index
    %212 = memref.load %arg2[%c67] : memref<112xf32, #tpu.memory_space<smem>>
    %213 = vector.broadcast %212 : f32 to vector<2x16xf32>
    %214 = arith.mulf %213, %203 : vector<2x16xf32>
    %215 = arith.addf %197, %214 : vector<2x16xf32>
    %c95 = arith.constant 95 : index
    %216 = memref.load %arg2[%c95] : memref<112xf32, #tpu.memory_space<smem>>
    %217 = vector.broadcast %216 : f32 to vector<2x16xf32>
    %218 = arith.mulf %217, %203 : vector<2x16xf32>
    %219 = arith.addf %201, %218 : vector<2x16xf32>
    %c0_39 = arith.constant 0 : index
    %c5_40 = arith.constant 5 : index
    %c1_41 = arith.constant 1 : index
    %220 = vector.load %arg1[%c0_39, %c5_40, %c1_41] : memref<2x16x17xf32, #tpu.memory_space<vmem>>, vector<2x1x16xf32>
    %221 = vector.shape_cast %220 : vector<2x1x16xf32> to vector<2x16xf32>
    %c12 = arith.constant 12 : index
    %222 = memref.load %arg2[%c12] : memref<112xf32, #tpu.memory_space<smem>>
    %223 = vector.broadcast %222 : f32 to vector<2x16xf32>
    %224 = arith.mulf %223, %221 : vector<2x16xf32>
    %225 = arith.addf %207, %224 : vector<2x16xf32>
    %c40 = arith.constant 40 : index
    %226 = memref.load %arg2[%c40] : memref<112xf32, #tpu.memory_space<smem>>
    %227 = vector.broadcast %226 : f32 to vector<2x16xf32>
    %228 = arith.mulf %227, %221 : vector<2x16xf32>
    %229 = arith.addf %211, %228 : vector<2x16xf32>
    %c68 = arith.constant 68 : index
    %230 = memref.load %arg2[%c68] : memref<112xf32, #tpu.memory_space<smem>>
    %231 = vector.broadcast %230 : f32 to vector<2x16xf32>
    %232 = arith.mulf %231, %221 : vector<2x16xf32>
    %233 = arith.addf %215, %232 : vector<2x16xf32>
    %c96 = arith.constant 96 : index
    %234 = memref.load %arg2[%c96] : memref<112xf32, #tpu.memory_space<smem>>
    %235 = vector.broadcast %234 : f32 to vector<2x16xf32>
    %236 = arith.mulf %235, %221 : vector<2x16xf32>
    %237 = arith.addf %219, %236 : vector<2x16xf32>
    %c0_42 = arith.constant 0 : index
    %c6_43 = arith.constant 6 : index
    %c1_44 = arith.constant 1 : index
    %238 = vector.load %arg1[%c0_42, %c6_43, %c1_44] : memref<2x16x17xf32, #tpu.memory_space<vmem>>, vector<2x1x16xf32>
    %239 = vector.shape_cast %238 : vector<2x1x16xf32> to vector<2x16xf32>
    %c13 = arith.constant 13 : index
    %240 = memref.load %arg2[%c13] : memref<112xf32, #tpu.memory_space<smem>>
    %241 = vector.broadcast %240 : f32 to vector<2x16xf32>
    %242 = arith.mulf %241, %239 : vector<2x16xf32>
    %243 = arith.addf %225, %242 : vector<2x16xf32>
    %c41 = arith.constant 41 : index
    %244 = memref.load %arg2[%c41] : memref<112xf32, #tpu.memory_space<smem>>
    %245 = vector.broadcast %244 : f32 to vector<2x16xf32>
    %246 = arith.mulf %245, %239 : vector<2x16xf32>
    %247 = arith.addf %229, %246 : vector<2x16xf32>
    %c69 = arith.constant 69 : index
    %248 = memref.load %arg2[%c69] : memref<112xf32, #tpu.memory_space<smem>>
    %249 = vector.broadcast %248 : f32 to vector<2x16xf32>
    %250 = arith.mulf %249, %239 : vector<2x16xf32>
    %251 = arith.addf %233, %250 : vector<2x16xf32>
    %c97 = arith.constant 97 : index
    %252 = memref.load %arg2[%c97] : memref<112xf32, #tpu.memory_space<smem>>
    %253 = vector.broadcast %252 : f32 to vector<2x16xf32>
    %254 = arith.mulf %253, %239 : vector<2x16xf32>
    %255 = arith.addf %237, %254 : vector<2x16xf32>
    %c0_45 = arith.constant 0 : index
    %c8_46 = arith.constant 8 : index
    %c0_47 = arith.constant 0 : index
    %256 = vector.load %arg1[%c0_45, %c8_46, %c0_47] : memref<2x16x17xf32, #tpu.memory_space<vmem>>, vector<2x1x16xf32>
    %257 = vector.shape_cast %256 : vector<2x1x16xf32> to vector<2x16xf32>
    %c14 = arith.constant 14 : index
    %258 = memref.load %arg2[%c14] : memref<112xf32, #tpu.memory_space<smem>>
    %259 = vector.broadcast %258 : f32 to vector<2x16xf32>
    %260 = arith.mulf %259, %257 : vector<2x16xf32>
    %261 = arith.addf %243, %260 : vector<2x16xf32>
    %c42 = arith.constant 42 : index
    %262 = memref.load %arg2[%c42] : memref<112xf32, #tpu.memory_space<smem>>
    %263 = vector.broadcast %262 : f32 to vector<2x16xf32>
    %264 = arith.mulf %263, %257 : vector<2x16xf32>
    %265 = arith.addf %247, %264 : vector<2x16xf32>
    %c70 = arith.constant 70 : index
    %266 = memref.load %arg2[%c70] : memref<112xf32, #tpu.memory_space<smem>>
    %267 = vector.broadcast %266 : f32 to vector<2x16xf32>
    %268 = arith.mulf %267, %257 : vector<2x16xf32>
    %269 = arith.addf %251, %268 : vector<2x16xf32>
    %c98 = arith.constant 98 : index
    %270 = memref.load %arg2[%c98] : memref<112xf32, #tpu.memory_space<smem>>
    %271 = vector.broadcast %270 : f32 to vector<2x16xf32>
    %272 = arith.mulf %271, %257 : vector<2x16xf32>
    %273 = arith.addf %255, %272 : vector<2x16xf32>
    %c0_48 = arith.constant 0 : index
    %c9_49 = arith.constant 9 : index
    %c0_50 = arith.constant 0 : index
    %274 = vector.load %arg1[%c0_48, %c9_49, %c0_50] : memref<2x16x17xf32, #tpu.memory_space<vmem>>, vector<2x1x16xf32>
    %275 = vector.shape_cast %274 : vector<2x1x16xf32> to vector<2x16xf32>
    %c15 = arith.constant 15 : index
    %276 = memref.load %arg2[%c15] : memref<112xf32, #tpu.memory_space<smem>>
    %277 = vector.broadcast %276 : f32 to vector<2x16xf32>
    %278 = arith.mulf %277, %275 : vector<2x16xf32>
    %279 = arith.addf %261, %278 : vector<2x16xf32>
    %c43 = arith.constant 43 : index
    %280 = memref.load %arg2[%c43] : memref<112xf32, #tpu.memory_space<smem>>
    %281 = vector.broadcast %280 : f32 to vector<2x16xf32>
    %282 = arith.mulf %281, %275 : vector<2x16xf32>
    %283 = arith.addf %265, %282 : vector<2x16xf32>
    %c71 = arith.constant 71 : index
    %284 = memref.load %arg2[%c71] : memref<112xf32, #tpu.memory_space<smem>>
    %285 = vector.broadcast %284 : f32 to vector<2x16xf32>
    %286 = arith.mulf %285, %275 : vector<2x16xf32>
    %287 = arith.addf %269, %286 : vector<2x16xf32>
    %c99 = arith.constant 99 : index
    %288 = memref.load %arg2[%c99] : memref<112xf32, #tpu.memory_space<smem>>
    %289 = vector.broadcast %288 : f32 to vector<2x16xf32>
    %290 = arith.mulf %289, %275 : vector<2x16xf32>
    %291 = arith.addf %273, %290 : vector<2x16xf32>
    %c0_51 = arith.constant 0 : index
    %c10_52 = arith.constant 10 : index
    %c0_53 = arith.constant 0 : index
    %292 = vector.load %arg1[%c0_51, %c10_52, %c0_53] : memref<2x16x17xf32, #tpu.memory_space<vmem>>, vector<2x1x16xf32>
    %293 = vector.shape_cast %292 : vector<2x1x16xf32> to vector<2x16xf32>
    %c16 = arith.constant 16 : index
    %294 = memref.load %arg2[%c16] : memref<112xf32, #tpu.memory_space<smem>>
    %295 = vector.broadcast %294 : f32 to vector<2x16xf32>
    %296 = arith.mulf %295, %293 : vector<2x16xf32>
    %297 = arith.addf %279, %296 : vector<2x16xf32>
    %c44 = arith.constant 44 : index
    %298 = memref.load %arg2[%c44] : memref<112xf32, #tpu.memory_space<smem>>
    %299 = vector.broadcast %298 : f32 to vector<2x16xf32>
    %300 = arith.mulf %299, %293 : vector<2x16xf32>
    %301 = arith.addf %283, %300 : vector<2x16xf32>
    %c72 = arith.constant 72 : index
    %302 = memref.load %arg2[%c72] : memref<112xf32, #tpu.memory_space<smem>>
    %303 = vector.broadcast %302 : f32 to vector<2x16xf32>
    %304 = arith.mulf %303, %293 : vector<2x16xf32>
    %305 = arith.addf %287, %304 : vector<2x16xf32>
    %c100 = arith.constant 100 : index
    %306 = memref.load %arg2[%c100] : memref<112xf32, #tpu.memory_space<smem>>
    %307 = vector.broadcast %306 : f32 to vector<2x16xf32>
    %308 = arith.mulf %307, %293 : vector<2x16xf32>
    %309 = arith.addf %291, %308 : vector<2x16xf32>
    %c0_54 = arith.constant 0 : index
    %c11_55 = arith.constant 11 : index
    %c0_56 = arith.constant 0 : index
    %310 = vector.load %arg1[%c0_54, %c11_55, %c0_56] : memref<2x16x17xf32, #tpu.memory_space<vmem>>, vector<2x1x16xf32>
    %311 = vector.shape_cast %310 : vector<2x1x16xf32> to vector<2x16xf32>
    %c17 = arith.constant 17 : index
    %312 = memref.load %arg2[%c17] : memref<112xf32, #tpu.memory_space<smem>>
    %313 = vector.broadcast %312 : f32 to vector<2x16xf32>
    %314 = arith.mulf %313, %311 : vector<2x16xf32>
    %315 = arith.addf %297, %314 : vector<2x16xf32>
    %c45 = arith.constant 45 : index
    %316 = memref.load %arg2[%c45] : memref<112xf32, #tpu.memory_space<smem>>
    %317 = vector.broadcast %316 : f32 to vector<2x16xf32>
    %318 = arith.mulf %317, %311 : vector<2x16xf32>
    %319 = arith.addf %301, %318 : vector<2x16xf32>
    %c73 = arith.constant 73 : index
    %320 = memref.load %arg2[%c73] : memref<112xf32, #tpu.memory_space<smem>>
    %321 = vector.broadcast %320 : f32 to vector<2x16xf32>
    %322 = arith.mulf %321, %311 : vector<2x16xf32>
    %323 = arith.addf %305, %322 : vector<2x16xf32>
    %c101 = arith.constant 101 : index
    %324 = memref.load %arg2[%c101] : memref<112xf32, #tpu.memory_space<smem>>
    %325 = vector.broadcast %324 : f32 to vector<2x16xf32>
    %326 = arith.mulf %325, %311 : vector<2x16xf32>
    %327 = arith.addf %309, %326 : vector<2x16xf32>
    %c0_57 = arith.constant 0 : index
    %c8_58 = arith.constant 8 : index
    %c1_59 = arith.constant 1 : index
    %328 = vector.load %arg1[%c0_57, %c8_58, %c1_59] : memref<2x16x17xf32, #tpu.memory_space<vmem>>, vector<2x1x16xf32>
    %329 = vector.shape_cast %328 : vector<2x1x16xf32> to vector<2x16xf32>
    %c18 = arith.constant 18 : index
    %330 = memref.load %arg2[%c18] : memref<112xf32, #tpu.memory_space<smem>>
    %331 = vector.broadcast %330 : f32 to vector<2x16xf32>
    %332 = arith.mulf %331, %329 : vector<2x16xf32>
    %333 = arith.addf %315, %332 : vector<2x16xf32>
    %c46 = arith.constant 46 : index
    %334 = memref.load %arg2[%c46] : memref<112xf32, #tpu.memory_space<smem>>
    %335 = vector.broadcast %334 : f32 to vector<2x16xf32>
    %336 = arith.mulf %335, %329 : vector<2x16xf32>
    %337 = arith.addf %319, %336 : vector<2x16xf32>
    %c74 = arith.constant 74 : index
    %338 = memref.load %arg2[%c74] : memref<112xf32, #tpu.memory_space<smem>>
    %339 = vector.broadcast %338 : f32 to vector<2x16xf32>
    %340 = arith.mulf %339, %329 : vector<2x16xf32>
    %341 = arith.addf %323, %340 : vector<2x16xf32>
    %c102 = arith.constant 102 : index
    %342 = memref.load %arg2[%c102] : memref<112xf32, #tpu.memory_space<smem>>
    %343 = vector.broadcast %342 : f32 to vector<2x16xf32>
    %344 = arith.mulf %343, %329 : vector<2x16xf32>
    %345 = arith.addf %327, %344 : vector<2x16xf32>
    %c0_60 = arith.constant 0 : index
    %c9_61 = arith.constant 9 : index
    %c1_62 = arith.constant 1 : index
    %346 = vector.load %arg1[%c0_60, %c9_61, %c1_62] : memref<2x16x17xf32, #tpu.memory_space<vmem>>, vector<2x1x16xf32>
    %347 = vector.shape_cast %346 : vector<2x1x16xf32> to vector<2x16xf32>
    %c19 = arith.constant 19 : index
    %348 = memref.load %arg2[%c19] : memref<112xf32, #tpu.memory_space<smem>>
    %349 = vector.broadcast %348 : f32 to vector<2x16xf32>
    %350 = arith.mulf %349, %347 : vector<2x16xf32>
    %351 = arith.addf %333, %350 : vector<2x16xf32>
    %c47 = arith.constant 47 : index
    %352 = memref.load %arg2[%c47] : memref<112xf32, #tpu.memory_space<smem>>
    %353 = vector.broadcast %352 : f32 to vector<2x16xf32>
    %354 = arith.mulf %353, %347 : vector<2x16xf32>
    %355 = arith.addf %337, %354 : vector<2x16xf32>
    %c75 = arith.constant 75 : index
    %356 = memref.load %arg2[%c75] : memref<112xf32, #tpu.memory_space<smem>>
    %357 = vector.broadcast %356 : f32 to vector<2x16xf32>
    %358 = arith.mulf %357, %347 : vector<2x16xf32>
    %359 = arith.addf %341, %358 : vector<2x16xf32>
    %c103 = arith.constant 103 : index
    %360 = memref.load %arg2[%c103] : memref<112xf32, #tpu.memory_space<smem>>
    %361 = vector.broadcast %360 : f32 to vector<2x16xf32>
    %362 = arith.mulf %361, %347 : vector<2x16xf32>
    %363 = arith.addf %345, %362 : vector<2x16xf32>
    %c0_63 = arith.constant 0 : index
    %c10_64 = arith.constant 10 : index
    %c1_65 = arith.constant 1 : index
    %364 = vector.load %arg1[%c0_63, %c10_64, %c1_65] : memref<2x16x17xf32, #tpu.memory_space<vmem>>, vector<2x1x16xf32>
    %365 = vector.shape_cast %364 : vector<2x1x16xf32> to vector<2x16xf32>
    %c20 = arith.constant 20 : index
    %366 = memref.load %arg2[%c20] : memref<112xf32, #tpu.memory_space<smem>>
    %367 = vector.broadcast %366 : f32 to vector<2x16xf32>
    %368 = arith.mulf %367, %365 : vector<2x16xf32>
    %369 = arith.addf %351, %368 : vector<2x16xf32>
    %c48 = arith.constant 48 : index
    %370 = memref.load %arg2[%c48] : memref<112xf32, #tpu.memory_space<smem>>
    %371 = vector.broadcast %370 : f32 to vector<2x16xf32>
    %372 = arith.mulf %371, %365 : vector<2x16xf32>
    %373 = arith.addf %355, %372 : vector<2x16xf32>
    %c76 = arith.constant 76 : index
    %374 = memref.load %arg2[%c76] : memref<112xf32, #tpu.memory_space<smem>>
    %375 = vector.broadcast %374 : f32 to vector<2x16xf32>
    %376 = arith.mulf %375, %365 : vector<2x16xf32>
    %377 = arith.addf %359, %376 : vector<2x16xf32>
    %c104 = arith.constant 104 : index
    %378 = memref.load %arg2[%c104] : memref<112xf32, #tpu.memory_space<smem>>
    %379 = vector.broadcast %378 : f32 to vector<2x16xf32>
    %380 = arith.mulf %379, %365 : vector<2x16xf32>
    %381 = arith.addf %363, %380 : vector<2x16xf32>
    %c0_66 = arith.constant 0 : index
    %c12_67 = arith.constant 12 : index
    %c0_68 = arith.constant 0 : index
    %382 = vector.load %arg1[%c0_66, %c12_67, %c0_68] : memref<2x16x17xf32, #tpu.memory_space<vmem>>, vector<2x1x16xf32>
    %383 = vector.shape_cast %382 : vector<2x1x16xf32> to vector<2x16xf32>
    %c21 = arith.constant 21 : index
    %384 = memref.load %arg2[%c21] : memref<112xf32, #tpu.memory_space<smem>>
    %385 = vector.broadcast %384 : f32 to vector<2x16xf32>
    %386 = arith.mulf %385, %383 : vector<2x16xf32>
    %387 = arith.addf %369, %386 : vector<2x16xf32>
    %c49 = arith.constant 49 : index
    %388 = memref.load %arg2[%c49] : memref<112xf32, #tpu.memory_space<smem>>
    %389 = vector.broadcast %388 : f32 to vector<2x16xf32>
    %390 = arith.mulf %389, %383 : vector<2x16xf32>
    %391 = arith.addf %373, %390 : vector<2x16xf32>
    %c77 = arith.constant 77 : index
    %392 = memref.load %arg2[%c77] : memref<112xf32, #tpu.memory_space<smem>>
    %393 = vector.broadcast %392 : f32 to vector<2x16xf32>
    %394 = arith.mulf %393, %383 : vector<2x16xf32>
    %395 = arith.addf %377, %394 : vector<2x16xf32>
    %c105 = arith.constant 105 : index
    %396 = memref.load %arg2[%c105] : memref<112xf32, #tpu.memory_space<smem>>
    %397 = vector.broadcast %396 : f32 to vector<2x16xf32>
    %398 = arith.mulf %397, %383 : vector<2x16xf32>
    %399 = arith.addf %381, %398 : vector<2x16xf32>
    %c0_69 = arith.constant 0 : index
    %c13_70 = arith.constant 13 : index
    %c0_71 = arith.constant 0 : index
    %400 = vector.load %arg1[%c0_69, %c13_70, %c0_71] : memref<2x16x17xf32, #tpu.memory_space<vmem>>, vector<2x1x16xf32>
    %401 = vector.shape_cast %400 : vector<2x1x16xf32> to vector<2x16xf32>
    %c22 = arith.constant 22 : index
    %402 = memref.load %arg2[%c22] : memref<112xf32, #tpu.memory_space<smem>>
    %403 = vector.broadcast %402 : f32 to vector<2x16xf32>
    %404 = arith.mulf %403, %401 : vector<2x16xf32>
    %405 = arith.addf %387, %404 : vector<2x16xf32>
    %c50 = arith.constant 50 : index
    %406 = memref.load %arg2[%c50] : memref<112xf32, #tpu.memory_space<smem>>
    %407 = vector.broadcast %406 : f32 to vector<2x16xf32>
    %408 = arith.mulf %407, %401 : vector<2x16xf32>
    %409 = arith.addf %391, %408 : vector<2x16xf32>
    %c78 = arith.constant 78 : index
    %410 = memref.load %arg2[%c78] : memref<112xf32, #tpu.memory_space<smem>>
    %411 = vector.broadcast %410 : f32 to vector<2x16xf32>
    %412 = arith.mulf %411, %401 : vector<2x16xf32>
    %413 = arith.addf %395, %412 : vector<2x16xf32>
    %c106 = arith.constant 106 : index
    %414 = memref.load %arg2[%c106] : memref<112xf32, #tpu.memory_space<smem>>
    %415 = vector.broadcast %414 : f32 to vector<2x16xf32>
    %416 = arith.mulf %415, %401 : vector<2x16xf32>
    %417 = arith.addf %399, %416 : vector<2x16xf32>
    %c0_72 = arith.constant 0 : index
    %c14_73 = arith.constant 14 : index
    %c0_74 = arith.constant 0 : index
    %418 = vector.load %arg1[%c0_72, %c14_73, %c0_74] : memref<2x16x17xf32, #tpu.memory_space<vmem>>, vector<2x1x16xf32>
    %419 = vector.shape_cast %418 : vector<2x1x16xf32> to vector<2x16xf32>
    %c23 = arith.constant 23 : index
    %420 = memref.load %arg2[%c23] : memref<112xf32, #tpu.memory_space<smem>>
    %421 = vector.broadcast %420 : f32 to vector<2x16xf32>
    %422 = arith.mulf %421, %419 : vector<2x16xf32>
    %423 = arith.addf %405, %422 : vector<2x16xf32>
    %c51 = arith.constant 51 : index
    %424 = memref.load %arg2[%c51] : memref<112xf32, #tpu.memory_space<smem>>
    %425 = vector.broadcast %424 : f32 to vector<2x16xf32>
    %426 = arith.mulf %425, %419 : vector<2x16xf32>
    %427 = arith.addf %409, %426 : vector<2x16xf32>
    %c79 = arith.constant 79 : index
    %428 = memref.load %arg2[%c79] : memref<112xf32, #tpu.memory_space<smem>>
    %429 = vector.broadcast %428 : f32 to vector<2x16xf32>
    %430 = arith.mulf %429, %419 : vector<2x16xf32>
    %431 = arith.addf %413, %430 : vector<2x16xf32>
    %c107 = arith.constant 107 : index
    %432 = memref.load %arg2[%c107] : memref<112xf32, #tpu.memory_space<smem>>
    %433 = vector.broadcast %432 : f32 to vector<2x16xf32>
    %434 = arith.mulf %433, %419 : vector<2x16xf32>
    %435 = arith.addf %417, %434 : vector<2x16xf32>
    %c0_75 = arith.constant 0 : index
    %c15_76 = arith.constant 15 : index
    %c0_77 = arith.constant 0 : index
    %436 = vector.load %arg1[%c0_75, %c15_76, %c0_77] : memref<2x16x17xf32, #tpu.memory_space<vmem>>, vector<2x1x16xf32>
    %437 = vector.shape_cast %436 : vector<2x1x16xf32> to vector<2x16xf32>
    %c24 = arith.constant 24 : index
    %438 = memref.load %arg2[%c24] : memref<112xf32, #tpu.memory_space<smem>>
    %439 = vector.broadcast %438 : f32 to vector<2x16xf32>
    %440 = arith.mulf %439, %437 : vector<2x16xf32>
    %441 = arith.addf %423, %440 : vector<2x16xf32>
    %c52 = arith.constant 52 : index
    %442 = memref.load %arg2[%c52] : memref<112xf32, #tpu.memory_space<smem>>
    %443 = vector.broadcast %442 : f32 to vector<2x16xf32>
    %444 = arith.mulf %443, %437 : vector<2x16xf32>
    %445 = arith.addf %427, %444 : vector<2x16xf32>
    %c80 = arith.constant 80 : index
    %446 = memref.load %arg2[%c80] : memref<112xf32, #tpu.memory_space<smem>>
    %447 = vector.broadcast %446 : f32 to vector<2x16xf32>
    %448 = arith.mulf %447, %437 : vector<2x16xf32>
    %449 = arith.addf %431, %448 : vector<2x16xf32>
    %c108 = arith.constant 108 : index
    %450 = memref.load %arg2[%c108] : memref<112xf32, #tpu.memory_space<smem>>
    %451 = vector.broadcast %450 : f32 to vector<2x16xf32>
    %452 = arith.mulf %451, %437 : vector<2x16xf32>
    %453 = arith.addf %435, %452 : vector<2x16xf32>
    %c0_78 = arith.constant 0 : index
    %c12_79 = arith.constant 12 : index
    %c1_80 = arith.constant 1 : index
    %454 = vector.load %arg1[%c0_78, %c12_79, %c1_80] : memref<2x16x17xf32, #tpu.memory_space<vmem>>, vector<2x1x16xf32>
    %455 = vector.shape_cast %454 : vector<2x1x16xf32> to vector<2x16xf32>
    %c25 = arith.constant 25 : index
    %456 = memref.load %arg2[%c25] : memref<112xf32, #tpu.memory_space<smem>>
    %457 = vector.broadcast %456 : f32 to vector<2x16xf32>
    %458 = arith.mulf %457, %455 : vector<2x16xf32>
    %459 = arith.addf %441, %458 : vector<2x16xf32>
    %c53 = arith.constant 53 : index
    %460 = memref.load %arg2[%c53] : memref<112xf32, #tpu.memory_space<smem>>
    %461 = vector.broadcast %460 : f32 to vector<2x16xf32>
    %462 = arith.mulf %461, %455 : vector<2x16xf32>
    %463 = arith.addf %445, %462 : vector<2x16xf32>
    %c81 = arith.constant 81 : index
    %464 = memref.load %arg2[%c81] : memref<112xf32, #tpu.memory_space<smem>>
    %465 = vector.broadcast %464 : f32 to vector<2x16xf32>
    %466 = arith.mulf %465, %455 : vector<2x16xf32>
    %467 = arith.addf %449, %466 : vector<2x16xf32>
    %c109 = arith.constant 109 : index
    %468 = memref.load %arg2[%c109] : memref<112xf32, #tpu.memory_space<smem>>
    %469 = vector.broadcast %468 : f32 to vector<2x16xf32>
    %470 = arith.mulf %469, %455 : vector<2x16xf32>
    %471 = arith.addf %453, %470 : vector<2x16xf32>
    %c0_81 = arith.constant 0 : index
    %c13_82 = arith.constant 13 : index
    %c1_83 = arith.constant 1 : index
    %472 = vector.load %arg1[%c0_81, %c13_82, %c1_83] : memref<2x16x17xf32, #tpu.memory_space<vmem>>, vector<2x1x16xf32>
    %473 = vector.shape_cast %472 : vector<2x1x16xf32> to vector<2x16xf32>
    %c26 = arith.constant 26 : index
    %474 = memref.load %arg2[%c26] : memref<112xf32, #tpu.memory_space<smem>>
    %475 = vector.broadcast %474 : f32 to vector<2x16xf32>
    %476 = arith.mulf %475, %473 : vector<2x16xf32>
    %477 = arith.addf %459, %476 : vector<2x16xf32>
    %c54 = arith.constant 54 : index
    %478 = memref.load %arg2[%c54] : memref<112xf32, #tpu.memory_space<smem>>
    %479 = vector.broadcast %478 : f32 to vector<2x16xf32>
    %480 = arith.mulf %479, %473 : vector<2x16xf32>
    %481 = arith.addf %463, %480 : vector<2x16xf32>
    %c82 = arith.constant 82 : index
    %482 = memref.load %arg2[%c82] : memref<112xf32, #tpu.memory_space<smem>>
    %483 = vector.broadcast %482 : f32 to vector<2x16xf32>
    %484 = arith.mulf %483, %473 : vector<2x16xf32>
    %485 = arith.addf %467, %484 : vector<2x16xf32>
    %c110 = arith.constant 110 : index
    %486 = memref.load %arg2[%c110] : memref<112xf32, #tpu.memory_space<smem>>
    %487 = vector.broadcast %486 : f32 to vector<2x16xf32>
    %488 = arith.mulf %487, %473 : vector<2x16xf32>
    %489 = arith.addf %471, %488 : vector<2x16xf32>
    %c0_84 = arith.constant 0 : index
    %c14_85 = arith.constant 14 : index
    %c1_86 = arith.constant 1 : index
    %490 = vector.load %arg1[%c0_84, %c14_85, %c1_86] : memref<2x16x17xf32, #tpu.memory_space<vmem>>, vector<2x1x16xf32>
    %491 = vector.shape_cast %490 : vector<2x1x16xf32> to vector<2x16xf32>
    %c27 = arith.constant 27 : index
    %492 = memref.load %arg2[%c27] : memref<112xf32, #tpu.memory_space<smem>>
    %493 = vector.broadcast %492 : f32 to vector<2x16xf32>
    %494 = arith.mulf %493, %491 : vector<2x16xf32>
    %495 = arith.addf %477, %494 : vector<2x16xf32>
    %c55 = arith.constant 55 : index
    %496 = memref.load %arg2[%c55] : memref<112xf32, #tpu.memory_space<smem>>
    %497 = vector.broadcast %496 : f32 to vector<2x16xf32>
    %498 = arith.mulf %497, %491 : vector<2x16xf32>
    %499 = arith.addf %481, %498 : vector<2x16xf32>
    %c83 = arith.constant 83 : index
    %500 = memref.load %arg2[%c83] : memref<112xf32, #tpu.memory_space<smem>>
    %501 = vector.broadcast %500 : f32 to vector<2x16xf32>
    %502 = arith.mulf %501, %491 : vector<2x16xf32>
    %503 = arith.addf %485, %502 : vector<2x16xf32>
    %c111 = arith.constant 111 : index
    %504 = memref.load %arg2[%c111] : memref<112xf32, #tpu.memory_space<smem>>
    %505 = vector.broadcast %504 : f32 to vector<2x16xf32>
    %506 = arith.mulf %505, %491 : vector<2x16xf32>
    %507 = arith.addf %489, %506 : vector<2x16xf32>
    %508 = vector.shape_cast %495 : vector<2x16xf32> to vector<2x1x16xf32>
    %509 = vector.shape_cast %499 : vector<2x16xf32> to vector<2x1x16xf32>
    %510 = vector.shape_cast %503 : vector<2x16xf32> to vector<2x1x16xf32>
    %511 = vector.shape_cast %507 : vector<2x16xf32> to vector<2x1x16xf32>
    %512 = tpu.concatenate %508, %509, %510, %511 in 1 : vector<2x1x16xf32>, vector<2x1x16xf32>, vector<2x1x16xf32>, vector<2x1x16xf32> -> vector<2x4x16xf32>
    %513 = arith.truncf %512 : vector<2x4x16xf32> to vector<2x4x16xbf16>
    %c0_87 = arith.constant 0 : index
    %c0_88 = arith.constant 0 : index
    %c0_89 = arith.constant 0 : index
    %514 = vector.load %arg3[%c0_87, %c0_88, %c0_89] : memref<2x4x16xbf16, #tpu.memory_space<vmem>>, vector<2x4x16xbf16>
    tpu.vector_store %arg3[%c0_87, %c0_88, %c0_89], %513 {strides = array<i32>} : memref<2x4x16xbf16, #tpu.memory_space<vmem>>, vector<2x4x16xbf16>,
    %cst_90 = arith.constant dense<0.000000e+00> : vector<4xf32>
    %515 = vector.multi_reduction <add>, %512, %cst_90 [0, 2] : vector<2x4x16xf32> to vector<4xf32>
    %cst_91 = arith.constant 3.125000e-02 : f32
    %516 = vector.broadcast %cst_91 : f32 to vector<4xf32>
    %517 = arith.mulf %515, %516 : vector<4xf32>
    %518 = vector.shape_cast %517 : vector<4xf32> to vector<1x4x1xf32>
    %519 = vector.broadcast %518 : vector<1x4x1xf32> to vector<2x4x16xf32>
    %520 = arith.subf %512, %519 : vector<2x4x16xf32>
    %521 = arith.mulf %520, %520 : vector<2x4x16xf32>
    %cst_92 = arith.constant dense<0.000000e+00> : vector<4xf32>
    %522 = vector.multi_reduction <add>, %521, %cst_92 [0, 2] : vector<2x4x16xf32> to vector<4xf32>
    %523 = tpu.concatenate %515, %522 in 0 : vector<4xf32>, vector<4xf32> -> vector<8xf32>
    %c0_93 = arith.constant 0 : index
    %c0_94 = arith.constant 0 : index
    %c0_95 = arith.constant 0 : index
    %524 = vector.load %arg4[%c0_93, %c0_94, %c0_95] : memref<1x1x8xf32, #tpu.memory_space<vmem>>, vector<1x1x8xf32>
    %525 = vector.shape_cast %524 : vector<1x1x8xf32> to vector<8xf32>
    %526 = vector.shape_cast %523 : vector<8xf32> to vector<1x1x8xf32>
    tpu.vector_store %arg4[%c0_93, %c0_94, %c0_95], %526 {strides = array<i32>} : memref<1x1x8xf32, #tpu.memory_space<vmem>>, vector<1x1x8xf32>,
    return
  }
  func.func @transform_0(%arg0: i32) -> (i32, i32, i32) {
    %c0_i32 = arith.constant 0 : i32
    %c0_i32_0 = arith.constant 0 : i32
    %c0_i32_1 = arith.constant 0 : i32
    return %arg0, %c0_i32, %c0_i32_0 : i32, i32, i32
  }
  func.func @transform_1(%arg0: i32) -> i32 {
    %c0_i32 = arith.constant 0 : i32
    %c0_i32_0 = arith.constant 0 : i32
    return %c0_i32 : i32
  }
  func.func @transform_2(%arg0: i32) -> (i32, i32, i32) {
    %c0_i32 = arith.constant 0 : i32
    %c0_i32_0 = arith.constant 0 : i32
    %c0_i32_1 = arith.constant 0 : i32
    return %arg0, %c0_i32, %c0_i32_0 : i32, i32, i32
  }
  func.func @transform_3(%arg0: i32) -> (i32, i32, i32) {
    %c0_i32 = arith.constant 0 : i32
    %c0_i32_0 = arith.constant 0 : i32
    %c0_i32_1 = arith.constant 0 : i32
    return %arg0, %c0_i32, %c0_i32_0 : i32, i32, i32
  }
}

</mosaic_0001>

<llo_original>
// kernel: tpu_custom_call.1
$region0: #{tpu_custom_call.1}
  #allocation0 [shape = 'u32[]', space=smem, size = 0x4, offset = 0x4, fixed_abs, tag = 'smem constant byte address 0x4 - core index']
  #allocation1 [shape = 'u32[144,128]{1,0:T(1,128)}', space=vmem, size = 0x12000, scoped, tag = 'internal scratch']
  %s0 = inlined_call_operand.hbm [shape: f32[2,16,17], index: 0, kind: input, shape index: {}]
  %s1 = inlined_call_operand.vmem [shape: f32[112], index: 1, kind: input, shape index: {}]
  %s2 = inlined_call_operand.hbm [shape: bf16[2,4,16], index: 2, kind: output, shape index: {0}]
  %s3 = inlined_call_operand.hbm [shape: f32[1,1,8], index: 3, kind: output, shape index: {1}]
  %4 = xla_tuple %s2, %s3
  %s5 = sld [smem:[#allocation0]]
  $region34: #{tpu_custom_call.1} parent=0
    _
  %s7 = ssub.s32 1, %s5
  %s8 = scalar_select 0, %s7, %s5
  $region1: #{tpu_custom_call.1} parent=0
    #allocation2 [shape = 'u8[16384]{0}', space=vmem, size = 0x4000, scoped, tag = 'input window, operand 0, single buffered']
    #allocation3 [shape = 's32[1]{0}', space=sflag, size = 0x4, scoped, tag = 'scoped memory for tpu_custom_call.1']
    #allocation4 [shape = 's32[1]{0}', space=sflag, size = 0x4, scoped, tag = 'scoped memory for tpu_custom_call.1']
    #allocation5 [shape = 's32[1]{0}', space=sflag, size = 0x4, scoped, tag = 'scoped memory for tpu_custom_call.1']
    #allocation6 [shape = 'u8[512]{0}', space=smem, size = 0x200, scoped, tag = 'input window, operand 1, single buffered']
    #allocation7 [shape = 'u8[2048]{0}', space=vmem, size = 0x800, scoped, tag = 'output window, operand 0, single buffered']
    #allocation8 [shape = 'u8[512]{0}', space=vmem, size = 0x400, scoped, tag = 'output window, operand 1, single buffered']
    #allocation9 [shape = 's32[1]{0}', space=sflag, size = 0x4, scoped, tag = 'scoped memory for tpu_custom_call.1']
    %9 = vsyncpa [#allocation3], 0
    %10 = vsyncpa [#allocation5], 0
    %11 = vsyncpa [#allocation4], 0
    %12 = vsyncpa [#allocation9], 0
    // Predicated region
    $region2: #{tpu_custom_call.1} parent=1 // pred_check
      _
    $region3: #{tpu_custom_call.1} parent=1 // pred_check_branch
      %14 = sbr.rel (0) target = $region5
    $region4: #{tpu_custom_call.1} parent=1 // pred_region
      %s16 = ssub.s32 512, 512
      %17 = vsyncadd [#allocation3], %s16
      %s18 = sshll.u32 [#allocation2], 4
      %s19 = int_to_ptr.vmem [resolvable:$true] %s18
      %24 = dma.hbm_to_vmem [thread:$0]  %s0, 512, %s19, [#allocation3], 128, 128, 8
    $region5: #{tpu_custom_call.1} parent=1 // pred_fallthru
      _
    // Predicated region
    $region6: #{tpu_custom_call.1} parent=1 // pred_check
      _
    $region7: #{tpu_custom_call.1} parent=1 // pred_check_branch
      %26 = sbr.rel (0) target = $region9
    $region8: #{tpu_custom_call.1} parent=1 // pred_region
      %s28 = ssub.s32 16, 16
      %29 = vsyncadd [#allocation5], %s28
      %s31 = sshll.u32 %s1, 4
      %s32 = int_to_ptr.vmem [resolvable:$true] %s31
      %34 = dma.vmem_to_smem %s32, 16, [#allocation6], [#allocation5]
    $region9: #{tpu_custom_call.1} parent=1 // pred_fallthru
      _
    // Predicated region
    $region10: #{tpu_custom_call.1} parent=1 // pred_check
      _
    $region11: #{tpu_custom_call.1} parent=1 // pred_check_branch
      %36 = sbr.rel (0) target = $region13
    $region12: #{tpu_custom_call.1} parent=1 // pred_region
      %37 = dma.done [#allocation3], 512
    $region13: #{tpu_custom_call.1} parent=1 // pred_fallthru
      _
    // Predicated region
    $region14: #{tpu_custom_call.1} parent=1 // pred_check
      _
    $region15: #{tpu_custom_call.1} parent=1 // pred_check_branch
      %39 = sbr.rel (0) target = $region17
    $region16: #{tpu_custom_call.1} parent=1 // pred_region
      %40 = dma.done [#allocation5], 16
    $region17: #{tpu_custom_call.1} parent=1 // pred_fallthru
      _
    %41 = sfence
    %v42 = vld [vmem:[#allocation2] sm:$0x1]
    %v43 = vld [vmem:[#allocation2 + $0x10] sm:$0x1]
    %s44 = sld [smem:[#allocation6]]
    %v45 = vstv %s44
    %v46 = vmul.f32 %v45, %v42
    %v47 = vmul.f32 %v45, %v43
    %v48 = vadd.f32 %v46, 0.0
    %v49 = vadd.f32 %v47, 0.0
    %s50 = sld [smem:[#allocation6 + $0x1c]]
    %v51 = vstv %s50
    %v52 = vmul.f32 %v51, %v42
    %v53 = vmul.f32 %v51, %v43
    %v54 = vadd.f32 %v52, 0.0
    %v55 = vadd.f32 %v53, 0.0
    %s56 = sld [smem:[#allocation6 + $0x38]]
    %v57 = vstv %s56
    %v58 = vmul.f32 %v57, %v42
    %v59 = vmul.f32 %v57, %v43
    %v60 = vadd.f32 %v58, 0.0
    %v61 = vadd.f32 %v59, 0.0
    %s62 = sld [smem:[#allocation6 + $0x54]]
    %v63 = vstv %s62
    %v64 = vmul.f32 %v63, %v42
    %v65 = vmul.f32 %v63, %v43
    %v66 = vadd.f32 %v64, 0.0
    %v67 = vadd.f32 %v65, 0.0
    %v68 = vld [vmem:[#allocation2 + $0x1] sm:$0x1]
    %v69 = vld [vmem:[#allocation2 + $0x11] sm:$0x1]
    %s70 = sld [smem:[#allocation6 + $0x1]]
    %v71 = vstv %s70
    %v72 = vmul.f32 %v71, %v68
    %v73 = vmul.f32 %v71, %v69
    %v74 = vadd.f32 %v48, %v72
    %v75 = vadd.f32 %v49, %v73
    %s76 = sld [smem:[#allocation6 + $0x1d]]
    %v77 = vstv %s76
    %v78 = vmul.f32 %v77, %v68
    %v79 = vmul.f32 %v77, %v69
    %v80 = vadd.f32 %v54, %v78
    %v81 = vadd.f32 %v55, %v79
    %s82 = sld [smem:[#allocation6 + $0x39]]
    %v83 = vstv %s82
    %v84 = vmul.f32 %v83, %v68
    %v85 = vmul.f32 %v83, %v69
    %v86 = vadd.f32 %v60, %v84
    %v87 = vadd.f32 %v61, %v85
    %s88 = sld [smem:[#allocation6 + $0x55]]
    %v89 = vstv %s88
    %v90 = vmul.f32 %v89, %v68
    %v91 = vmul.f32 %v89, %v69
    %v92 = vadd.f32 %v66, %v90
    %v93 = vadd.f32 %v67, %v91
    %v94 = vld [vmem:[#allocation2 + $0x2] sm:$0x1]
    %v95 = vld [vmem:[#allocation2 + $0x12] sm:$0x1]
    %s96 = sld [smem:[#allocation6 + $0x2]]
    %v97 = vstv %s96
    %v98 = vmul.f32 %v97, %v94
    %v99 = vmul.f32 %v97, %v95
    %v100 = vadd.f32 %v74, %v98
    %v101 = vadd.f32 %v75, %v99
    %s102 = sld [smem:[#allocation6 + $0x1e]]
    %v103 = vstv %s102
    %v104 = vmul.f32 %v103, %v94
    %v105 = vmul.f32 %v103, %v95
    %v106 = vadd.f32 %v80, %v104
    %v107 = vadd.f32 %v81, %v105
    %s108 = sld [smem:[#allocation6 + $0x3a]]
    %v109 = vstv %s108
    %v110 = vmul.f32 %v109, %v94
    %v111 = vmul.f32 %v109, %v95
    %v112 = vadd.f32 %v86, %v110
    %v113 = vadd.f32 %v87, %v111
    %s114 = sld [smem:[#allocation6 + $0x56]]
    %v115 = vstv %s114
    %v116 = vmul.f32 %v115, %v94
    %v117 = vmul.f32 %v115, %v95
    %v118 = vadd.f32 %v92, %v116
    %v119 = vadd.f32 %v93, %v117
    %v120 = vld [vmem:[#allocation2 + $0x3] sm:$0x1]
    %v121 = vld [vmem:[#allocation2 + $0x13] sm:$0x1]
    %s122 = sld [smem:[#allocation6 + $0x3]]
    %v123 = vstv %s122
    %v124 = vmul.f32 %v123, %v120
    %v125 = vmul.f32 %v123, %v121
    %v126 = vadd.f32 %v100, %v124
    %v127 = vadd.f32 %v101, %v125
    %s128 = sld [smem:[#allocation6 + $0x1f]]
    %v129 = vstv %s128
    %v130 = vmul.f32 %v129, %v120
    %v131 = vmul.f32 %v129, %v121
    %v132 = vadd.f32 %v106, %v130
    %v133 = vadd.f32 %v107, %v131
    %s134 = sld [smem:[#allocation6 + $0x3b]]
    %v135 = vstv %s134
    %v136 = vmul.f32 %v135, %v120
    %v137 = vmul.f32 %v135, %v121
    %v138 = vadd.f32 %v112, %v136
    %v139 = vadd.f32 %v113, %v137
    %s140 = sld [smem:[#allocation6 + $0x57]]
    %v141 = vstv %s140
    %v142 = vmul.f32 %v141, %v120
    %v143 = vmul.f32 %v141, %v121
    %v144 = vadd.f32 %v118, %v142
    %v145 = vadd.f32 %v119, %v143
    %s146 = sld [smem:[#allocation6 + $0x4]]
    %v147 = vstv %s146
    %v148 = vmul.f32 %v147, %v42
    %v149 = vmul.f32 %v147, %v43
    %152 = vrot.lane.b32.xlu0 %v148, 127
    %v153 = vpop.permute.xlu0 %152
    %154 = vrot.lane.b32.xlu0 %v149, 127
    %v155 = vpop.permute.xlu0 %154
    %v158 = vadd.f32 %v126, %v153
    %v159 = vadd.f32 %v127, %v155
    %s160 = sld [smem:[#allocation6 + $0x20]]
    %v161 = vstv %s160
    %v162 = vmul.f32 %v161, %v42
    %v163 = vmul.f32 %v161, %v43
    %166 = vrot.lane.b32.xlu0 %v162, 127
    %v167 = vpop.permute.xlu0 %166
    %168 = vrot.lane.b32.xlu0 %v163, 127
    %v169 = vpop.permute.xlu0 %168
    %v172 = vadd.f32 %v132, %v167
    %v173 = vadd.f32 %v133, %v169
    %s174 = sld [smem:[#allocation6 + $0x3c]]
    %v175 = vstv %s174
    %v176 = vmul.f32 %v175, %v42
    %v177 = vmul.f32 %v175, %v43
    %180 = vrot.lane.b32.xlu0 %v176, 127
    %v181 = vpop.permute.xlu0 %180
    %182 = vrot.lane.b32.xlu0 %v177, 127
    %v183 = vpop.permute.xlu0 %182
    %v186 = vadd.f32 %v138, %v181
    %v187 = vadd.f32 %v139, %v183
    %s188 = sld [smem:[#allocation6 + $0x58]]
    %v189 = vstv %s188
    %v190 = vmul.f32 %v189, %v42
    %v191 = vmul.f32 %v189, %v43
    %194 = vrot.lane.b32.xlu0 %v190, 127
    %v195 = vpop.permute.xlu0 %194
    %196 = vrot.lane.b32.xlu0 %v191, 127
    %v197 = vpop.permute.xlu0 %196
    %v200 = vadd.f32 %v144, %v195
    %v201 = vadd.f32 %v145, %v197
    %s202 = sld [smem:[#allocation6 + $0x5]]
    %v203 = vstv %s202
    %v204 = vmul.f32 %v203, %v68
    %v205 = vmul.f32 %v203, %v69
    %208 = vrot.lane.b32.xlu0 %v204, 127
    %v209 = vpop.permute.xlu0 %208
    %210 = vrot.lane.b32.xlu0 %v205, 127
    %v211 = vpop.permute.xlu0 %210
    %v214 = vadd.f32 %v158, %v209
    %v215 = vadd.f32 %v159, %v211
    %s216 = sld [smem:[#allocation6 + $0x21]]
    %v217 = vstv %s216
    %v218 = vmul.f32 %v217, %v68
    %v219 = vmul.f32 %v217, %v69
    %222 = vrot.lane.b32.xlu0 %v218, 127
    %v223 = vpop.permute.xlu0 %222
    %224 = vrot.lane.b32.xlu0 %v219, 127
    %v225 = vpop.permute.xlu0 %224
    %v228 = vadd.f32 %v172, %v223
    %v229 = vadd.f32 %v173, %v225
    %s230 = sld [smem:[#allocation6 + $0x3d]]
    %v231 = vstv %s230
    %v232 = vmul.f32 %v231, %v68
    %v233 = vmul.f32 %v231, %v69
    %236 = vrot.lane.b32.xlu0 %v232, 127
    %v237 = vpop.permute.xlu0 %236
    %238 = vrot.lane.b32.xlu0 %v233, 127
    %v239 = vpop.permute.xlu0 %238
    %v242 = vadd.f32 %v186, %v237
    %v243 = vadd.f32 %v187, %v239
    %s244 = sld [smem:[#allocation6 + $0x59]]
    %v245 = vstv %s244
    %v246 = vmul.f32 %v245, %v68
    %v247 = vmul.f32 %v245, %v69
    %250 = vrot.lane.b32.xlu0 %v246, 127
    %v251 = vpop.permute.xlu0 %250
    %252 = vrot.lane.b32.xlu0 %v247, 127
    %v253 = vpop.permute.xlu0 %252
    %v256 = vadd.f32 %v200, %v251
    %v257 = vadd.f32 %v201, %v253
    %s258 = sld [smem:[#allocation6 + $0x6]]
    %v259 = vstv %s258
    %v260 = vmul.f32 %v259, %v94
    %v261 = vmul.f32 %v259, %v95
    %264 = vrot.lane.b32.xlu0 %v260, 127
    %v265 = vpop.permute.xlu0 %264
    %266 = vrot.lane.b32.xlu0 %v261, 127
    %v267 = vpop.permute.xlu0 %266
    %v270 = vadd.f32 %v214, %v265
    %v271 = vadd.f32 %v215, %v267
    %s272 = sld [smem:[#allocation6 + $0x22]]
    %v273 = vstv %s272
    %v274 = vmul.f32 %v273, %v94
    %v275 = vmul.f32 %v273, %v95
    %278 = vrot.lane.b32.xlu0 %v274, 127
    %v279 = vpop.permute.xlu0 %278
    %280 = vrot.lane.b32.xlu0 %v275, 127
    %v281 = vpop.permute.xlu0 %280
    %v284 = vadd.f32 %v228, %v279
    %v285 = vadd.f32 %v229, %v281
    %s286 = sld [smem:[#allocation6 + $0x3e]]
    %v287 = vstv %s286
    %v288 = vmul.f32 %v287, %v94
    %v289 = vmul.f32 %v287, %v95
    %292 = vrot.lane.b32.xlu0 %v288, 127
    %v293 = vpop.permute.xlu0 %292
    %294 = vrot.lane.b32.xlu0 %v289, 127
    %v295 = vpop.permute.xlu0 %294
    %v298 = vadd.f32 %v242, %v293
    %v299 = vadd.f32 %v243, %v295
    %s300 = sld [smem:[#allocation6 + $0x5a]]
    %v301 = vstv %s300
    %v302 = vmul.f32 %v301, %v94
    %v303 = vmul.f32 %v301, %v95
    %306 = vrot.lane.b32.xlu0 %v302, 127
    %v307 = vpop.permute.xlu0 %306
    %308 = vrot.lane.b32.xlu0 %v303, 127
    %v309 = vpop.permute.xlu0 %308
    %v312 = vadd.f32 %v256, %v307
    %v313 = vadd.f32 %v257, %v309
    %v314 = vld [vmem:[#allocation2 + $0x4] sm:$0x1]
    %v315 = vld [vmem:[#allocation2 + $0x14] sm:$0x1]
    %s316 = sld [smem:[#allocation6 + $0x7]]
    %v317 = vstv %s316
    %v318 = vmul.f32 %v317, %v314
    %v319 = vmul.f32 %v317, %v315
    %v320 = vadd.f32 %v270, %v318
    %v321 = vadd.f32 %v271, %v319
    %s322 = sld [smem:[#allocation6 + $0x23]]
    %v323 = vstv %s322
    %v324 = vmul.f32 %v323, %v314
    %v325 = vmul.f32 %v323, %v315
    %v326 = vadd.f32 %v284, %v324
    %v327 = vadd.f32 %v285, %v325
    %s328 = sld [smem:[#allocation6 + $0x3f]]
    %v329 = vstv %s328
    %v330 = vmul.f32 %v329, %v314
    %v331 = vmul.f32 %v329, %v315
    %v332 = vadd.f32 %v298, %v330
    %v333 = vadd.f32 %v299, %v331
    %s334 = sld [smem:[#allocation6 + $0x5b]]
    %v335 = vstv %s334
    %v336 = vmul.f32 %v335, %v314
    %v337 = vmul.f32 %v335, %v315
    %v338 = vadd.f32 %v312, %v336
    %v339 = vadd.f32 %v313, %v337
    %v340 = vld [vmem:[#allocation2 + $0x5] sm:$0x1]
    %v341 = vld [vmem:[#allocation2 + $0x15] sm:$0x1]
    %s342 = sld [smem:[#allocation6 + $0x8]]
    %v343 = vstv %s342
    %v344 = vmul.f32 %v343, %v340
    %v345 = vmul.f32 %v343, %v341
    %v346 = vadd.f32 %v320, %v344
    %v347 = vadd.f32 %v321, %v345
    %s348 = sld [smem:[#allocation6 + $0x24]]
    %v349 = vstv %s348
    %v350 = vmul.f32 %v349, %v340
    %v351 = vmul.f32 %v349, %v341
    %v352 = vadd.f32 %v326, %v350
    %v353 = vadd.f32 %v327, %v351
    %s354 = sld [smem:[#allocation6 + $0x40]]
    %v355 = vstv %s354
    %v356 = vmul.f32 %v355, %v340
    %v357 = vmul.f32 %v355, %v341
    %v358 = vadd.f32 %v332, %v356
    %v359 = vadd.f32 %v333, %v357
    %s360 = sld [smem:[#allocation6 + $0x5c]]
    %v361 = vstv %s360
    %v362 = vmul.f32 %v361, %v340
    %v363 = vmul.f32 %v361, %v341
    %v364 = vadd.f32 %v338, %v362
    %v365 = vadd.f32 %v339, %v363
    %v366 = vld [vmem:[#allocation2 + $0x6] sm:$0x1]
    %v367 = vld [vmem:[#allocation2 + $0x16] sm:$0x1]
    %s368 = sld [smem:[#allocation6 + $0x9]]
    %v369 = vstv %s368
    %v370 = vmul.f32 %v369, %v366
    %v371 = vmul.f32 %v369, %v367
    %v372 = vadd.f32 %v346, %v370
    %v373 = vadd.f32 %v347, %v371
    %s374 = sld [smem:[#allocation6 + $0x25]]
    %v375 = vstv %s374
    %v376 = vmul.f32 %v375, %v366
    %v377 = vmul.f32 %v375, %v367
    %v378 = vadd.f32 %v352, %v376
    %v379 = vadd.f32 %v353, %v377
    %s380 = sld [smem:[#allocation6 + $0x41]]
    %v381 = vstv %s380
    %v382 = vmul.f32 %v381, %v366
    %v383 = vmul.f32 %v381, %v367
    %v384 = vadd.f32 %v358, %v382
    %v385 = vadd.f32 %v359, %v383
    %s386 = sld [smem:[#allocation6 + $0x5d]]
    %v387 = vstv %s386
    %v388 = vmul.f32 %v387, %v366
    %v389 = vmul.f32 %v387, %v367
    %v390 = vadd.f32 %v364, %v388
    %v391 = vadd.f32 %v365, %v389
    %v392 = vld [vmem:[#allocation2 + $0x7] sm:$0x1]
    %v393 = vld [vmem:[#allocation2 + $0x17] sm:$0x1]
    %s394 = sld [smem:[#allocation6 + $0xa]]
    %v395 = vstv %s394
    %v396 = vmul.f32 %v395, %v392
    %v397 = vmul.f32 %v395, %v393
    %v398 = vadd.f32 %v372, %v396
    %v399 = vadd.f32 %v373, %v397
    %s400 = sld [smem:[#allocation6 + $0x26]]
    %v401 = vstv %s400
    %v402 = vmul.f32 %v401, %v392
    %v403 = vmul.f32 %v401, %v393
    %v404 = vadd.f32 %v378, %v402
    %v405 = vadd.f32 %v379, %v403
    %s406 = sld [smem:[#allocation6 + $0x42]]
    %v407 = vstv %s406
    %v408 = vmul.f32 %v407, %v392
    %v409 = vmul.f32 %v407, %v393
    %v410 = vadd.f32 %v384, %v408
    %v411 = vadd.f32 %v385, %v409
    %s412 = sld [smem:[#allocation6 + $0x5e]]
    %v413 = vstv %s412
    %v414 = vmul.f32 %v413, %v392
    %v415 = vmul.f32 %v413, %v393
    %v416 = vadd.f32 %v390, %v414
    %v417 = vadd.f32 %v391, %v415
    %s418 = sld [smem:[#allocation6 + $0xb]]
    %v419 = vstv %s418
    %v420 = vmul.f32 %v419, %v314
    %v421 = vmul.f32 %v419, %v315
    %424 = vrot.lane.b32.xlu0 %v420, 127
    %v425 = vpop.permute.xlu0 %424
    %426 = vrot.lane.b32.xlu0 %v421, 127
    %v427 = vpop.permute.xlu0 %426
    %v430 = vadd.f32 %v398, %v425
    %v431 = vadd.f32 %v399, %v427
    %s432 = sld [smem:[#allocation6 + $0x27]]
    %v433 = vstv %s432
    %v434 = vmul.f32 %v433, %v314
    %v435 = vmul.f32 %v433, %v315
    %438 = vrot.lane.b32.xlu0 %v434, 127
    %v439 = vpop.permute.xlu0 %438
    %440 = vrot.lane.b32.xlu0 %v435, 127
    %v441 = vpop.permute.xlu0 %440
    %v444 = vadd.f32 %v404, %v439
    %v445 = vadd.f32 %v405, %v441
    %s446 = sld [smem:[#allocation6 + $0x43]]
    %v447 = vstv %s446
    %v448 = vmul.f32 %v447, %v314
    %v449 = vmul.f32 %v447, %v315
    %452 = vrot.lane.b32.xlu0 %v448, 127
    %v453 = vpop.permute.xlu0 %452
    %454 = vrot.lane.b32.xlu0 %v449, 127
    %v455 = vpop.permute.xlu0 %454
    %v458 = vadd.f32 %v410, %v453
    %v459 = vadd.f32 %v411, %v455
    %s460 = sld [smem:[#allocation6 + $0x5f]]
    %v461 = vstv %s460
    %v462 = vmul.f32 %v461, %v314
    %v463 = vmul.f32 %v461, %v315
    %466 = vrot.lane.b32.xlu0 %v462, 127
    %v467 = vpop.permute.xlu0 %466
    %468 = vrot.lane.b32.xlu0 %v463, 127
    %v469 = vpop.permute.xlu0 %468
    %v472 = vadd.f32 %v416, %v467
    %v473 = vadd.f32 %v417, %v469
    %s474 = sld [smem:[#allocation6 + $0xc]]
    %v475 = vstv %s474
    %v476 = vmul.f32 %v475, %v340
    %v477 = vmul.f32 %v475, %v341
    %480 = vrot.lane.b32.xlu0 %v476, 127
    %v481 = vpop.permute.xlu0 %480
    %482 = vrot.lane.b32.xlu0 %v477, 127
    %v483 = vpop.permute.xlu0 %482
    %v486 = vadd.f32 %v430, %v481
    %v487 = vadd.f32 %v431, %v483
    %s488 = sld [smem:[#allocation6 + $0x28]]
    %v489 = vstv %s488
    %v490 = vmul.f32 %v489, %v340
    %v491 = vmul.f32 %v489, %v341
    %494 = vrot.lane.b32.xlu0 %v490, 127
    %v495 = vpop.permute.xlu0 %494
    %496 = vrot.lane.b32.xlu0 %v491, 127
    %v497 = vpop.permute.xlu0 %496
    %v500 = vadd.f32 %v444, %v495
    %v501 = vadd.f32 %v445, %v497
    %s502 = sld [smem:[#allocation6 + $0x44]]
    %v503 = vstv %s502
    %v504 = vmul.f32 %v503, %v340
    %v505 = vmul.f32 %v503, %v341
    %508 = vrot.lane.b32.xlu0 %v504, 127
    %v509 = vpop.permute.xlu0 %508
    %510 = vrot.lane.b32.xlu0 %v505, 127
    %v511 = vpop.permute.xlu0 %510
    %v514 = vadd.f32 %v458, %v509
    %v515 = vadd.f32 %v459, %v511
    %s516 = sld [smem:[#allocation6 + $0x60]]
    %v517 = vstv %s516
    %v518 = vmul.f32 %v517, %v340
    %v519 = vmul.f32 %v517, %v341
    %522 = vrot.lane.b32.xlu0 %v518, 127
    %v523 = vpop.permute.xlu0 %522
    %524 = vrot.lane.b32.xlu0 %v519, 127
    %v525 = vpop.permute.xlu0 %524
    %v528 = vadd.f32 %v472, %v523
    %v529 = vadd.f32 %v473, %v525
    %s530 = sld [smem:[#allocation6 + $0xd]]
    %v531 = vstv %s530
    %v532 = vmul.f32 %v531, %v366
    %v533 = vmul.f32 %v531, %v367
    %536 = vrot.lane.b32.xlu0 %v532, 127
    %v537 = vpop.permute.xlu0 %536
    %538 = vrot.lane.b32.xlu0 %v533, 127
    %v539 = vpop.permute.xlu0 %538
    %v542 = vadd.f32 %v486, %v537
    %v543 = vadd.f32 %v487, %v539
    %s544 = sld [smem:[#allocation6 + $0x29]]
    %v545 = vstv %s544
    %v546 = vmul.f32 %v545, %v366
    %v547 = vmul.f32 %v545, %v367
    %550 = vrot.lane.b32.xlu0 %v546, 127
    %v551 = vpop.permute.xlu0 %550
    %552 = vrot.lane.b32.xlu0 %v547, 127
    %v553 = vpop.permute.xlu0 %552
    %v556 = vadd.f32 %v500, %v551
    %v557 = vadd.f32 %v501, %v553
    %s558 = sld [smem:[#allocation6 + $0x45]]
    %v559 = vstv %s558
    %v560 = vmul.f32 %v559, %v366
    %v561 = vmul.f32 %v559, %v367
    %564 = vrot.lane.b32.xlu0 %v560, 127
    %v565 = vpop.permute.xlu0 %564
    %566 = vrot.lane.b32.xlu0 %v561, 127
    %v567 = vpop.permute.xlu0 %566
    %v570 = vadd.f32 %v514, %v565
    %v571 = vadd.f32 %v515, %v567
    %s572 = sld [smem:[#allocation6 + $0x61]]
    %v573 = vstv %s572
    %v574 = vmul.f32 %v573, %v366
    %v575 = vmul.f32 %v573, %v367
    %578 = vrot.lane.b32.xlu0 %v574, 127
    %v579 = vpop.permute.xlu0 %578
    %580 = vrot.lane.b32.xlu0 %v575, 127
    %v581 = vpop.permute.xlu0 %580
    %v584 = vadd.f32 %v528, %v579
    %v585 = vadd.f32 %v529, %v581
    %v586 = vld [vmem:[#allocation2 + $0x8] sm:$0x1]
    %v587 = vld [vmem:[#allocation2 + $0x18] sm:$0x1]
    %s588 = sld [smem:[#allocation6 + $0xe]]
    %v589 = vstv %s588
    %v590 = vmul.f32 %v589, %v586
    %v591 = vmul.f32 %v589, %v587
    %v592 = vadd.f32 %v542, %v590
    %v593 = vadd.f32 %v543, %v591
    %s594 = sld [smem:[#allocation6 + $0x2a]]
    %v595 = vstv %s594
    %v596 = vmul.f32 %v595, %v586
    %v597 = vmul.f32 %v595, %v587
    %v598 = vadd.f32 %v556, %v596
    %v599 = vadd.f32 %v557, %v597
    %s600 = sld [smem:[#allocation6 + $0x46]]
    %v601 = vstv %s600
    %v602 = vmul.f32 %v601, %v586
    %v603 = vmul.f32 %v601, %v587
    %v604 = vadd.f32 %v570, %v602
    %v605 = vadd.f32 %v571, %v603
    %s606 = sld [smem:[#allocation6 + $0x62]]
    %v607 = vstv %s606
    %v608 = vmul.f32 %v607, %v586
    %v609 = vmul.f32 %v607, %v587
    %v610 = vadd.f32 %v584, %v608
    %v611 = vadd.f32 %v585, %v609
    %v612 = vld [vmem:[#allocation2 + $0x9] sm:$0x1]
    %v613 = vld [vmem:[#allocation2 + $0x19] sm:$0x1]
    %s614 = sld [smem:[#allocation6 + $0xf]]
    %v615 = vstv %s614
    %v616 = vmul.f32 %v615, %v612
    %v617 = vmul.f32 %v615, %v613
    %v618 = vadd.f32 %v592, %v616
    %v619 = vadd.f32 %v593, %v617
    %s620 = sld [smem:[#allocation6 + $0x2b]]
    %v621 = vstv %s620
    %v622 = vmul.f32 %v621, %v612
    %v623 = vmul.f32 %v621, %v613
    %v624 = vadd.f32 %v598, %v622
    %v625 = vadd.f32 %v599, %v623
    %s626 = sld [smem:[#allocation6 + $0x47]]
    %v627 = vstv %s626
    %v628 = vmul.f32 %v627, %v612
    %v629 = vmul.f32 %v627, %v613
    %v630 = vadd.f32 %v604, %v628
    %v631 = vadd.f32 %v605, %v629
    %s632 = sld [smem:[#allocation6 + $0x63]]
    %v633 = vstv %s632
    %v634 = vmul.f32 %v633, %v612
    %v635 = vmul.f32 %v633, %v613
    %v636 = vadd.f32 %v610, %v634
    %v637 = vadd.f32 %v611, %v635
    %v638 = vld [vmem:[#allocation2 + $0xa] sm:$0x1]
    %v639 = vld [vmem:[#allocation2 + $0x1a] sm:$0x1]
    %s640 = sld [smem:[#allocation6 + $0x10]]
    %v641 = vstv %s640
    %v642 = vmul.f32 %v641, %v638
    %v643 = vmul.f32 %v641, %v639
    %v644 = vadd.f32 %v618, %v642
    %v645 = vadd.f32 %v619, %v643
    %s646 = sld [smem:[#allocation6 + $0x2c]]
    %v647 = vstv %s646
    %v648 = vmul.f32 %v647, %v638
    %v649 = vmul.f32 %v647, %v639
    %v650 = vadd.f32 %v624, %v648
    %v651 = vadd.f32 %v625, %v649
    %s652 = sld [smem:[#allocation6 + $0x48]]
    %v653 = vstv %s652
    %v654 = vmul.f32 %v653, %v638
    %v655 = vmul.f32 %v653, %v639
    %v656 = vadd.f32 %v630, %v654
    %v657 = vadd.f32 %v631, %v655
    %s658 = sld [smem:[#allocation6 + $0x64]]
    %v659 = vstv %s658
    %v660 = vmul.f32 %v659, %v638
    %v661 = vmul.f32 %v659, %v639
    %v662 = vadd.f32 %v636, %v660
    %v663 = vadd.f32 %v637, %v661
    %v664 = vld [vmem:[#allocation2 + $0xb] sm:$0x1]
    %v665 = vld [vmem:[#allocation2 + $0x1b] sm:$0x1]
    %s666 = sld [smem:[#allocation6 + $0x11]]
    %v667 = vstv %s666
    %v668 = vmul.f32 %v667, %v664
    %v669 = vmul.f32 %v667, %v665
    %v670 = vadd.f32 %v644, %v668
    %v671 = vadd.f32 %v645, %v669
    %s672 = sld [smem:[#allocation6 + $0x2d]]
    %v673 = vstv %s672
    %v674 = vmul.f32 %v673, %v664
    %v675 = vmul.f32 %v673, %v665
    %v676 = vadd.f32 %v650, %v674
    %v677 = vadd.f32 %v651, %v675
    %s678 = sld [smem:[#allocation6 + $0x49]]
    %v679 = vstv %s678
    %v680 = vmul.f32 %v679, %v664
    %v681 = vmul.f32 %v679, %v665
    %v682 = vadd.f32 %v656, %v680
    %v683 = vadd.f32 %v657, %v681
    %s684 = sld [smem:[#allocation6 + $0x65]]
    %v685 = vstv %s684
    %v686 = vmul.f32 %v685, %v664
    %v687 = vmul.f32 %v685, %v665
    %v688 = vadd.f32 %v662, %v686
    %v689 = vadd.f32 %v663, %v687
    %s690 = sld [smem:[#allocation6 + $0x12]]
    %v691 = vstv %s690
    %v692 = vmul.f32 %v691, %v586
    %v693 = vmul.f32 %v691, %v587
    %696 = vrot.lane.b32.xlu0 %v692, 127
    %v697 = vpop.permute.xlu0 %696
    %698 = vrot.lane.b32.xlu0 %v693, 127
    %v699 = vpop.permute.xlu0 %698
    %v702 = vadd.f32 %v670, %v697
    %v703 = vadd.f32 %v671, %v699
    %s704 = sld [smem:[#allocation6 + $0x2e]]
    %v705 = vstv %s704
    %v706 = vmul.f32 %v705, %v586
    %v707 = vmul.f32 %v705, %v587
    %710 = vrot.lane.b32.xlu0 %v706, 127
    %v711 = vpop.permute.xlu0 %710
    %712 = vrot.lane.b32.xlu0 %v707, 127
    %v713 = vpop.permute.xlu0 %712
    %v716 = vadd.f32 %v676, %v711
    %v717 = vadd.f32 %v677, %v713
    %s718 = sld [smem:[#allocation6 + $0x4a]]
    %v719 = vstv %s718
    %v720 = vmul.f32 %v719, %v586
    %v721 = vmul.f32 %v719, %v587
    %724 = vrot.lane.b32.xlu0 %v720, 127
    %v725 = vpop.permute.xlu0 %724
    %726 = vrot.lane.b32.xlu0 %v721, 127
    %v727 = vpop.permute.xlu0 %726
    %v730 = vadd.f32 %v682, %v725
    %v731 = vadd.f32 %v683, %v727
    %s732 = sld [smem:[#allocation6 + $0x66]]
    %v733 = vstv %s732
    %v734 = vmul.f32 %v733, %v586
    %v735 = vmul.f32 %v733, %v587
    %738 = vrot.lane.b32.xlu0 %v734, 127
    %v739 = vpop.permute.xlu0 %738
    %740 = vrot.lane.b32.xlu0 %v735, 127
    %v741 = vpop.permute.xlu0 %740
    %v744 = vadd.f32 %v688, %v739
    %v745 = vadd.f32 %v689, %v741
    %s746 = sld [smem:[#allocation6 + $0x13]]
    %v747 = vstv %s746
    %v748 = vmul.f32 %v747, %v612
    %v749 = vmul.f32 %v747, %v613
    %752 = vrot.lane.b32.xlu0 %v748, 127
    %v753 = vpop.permute.xlu0 %752
    %754 = vrot.lane.b32.xlu0 %v749, 127
    %v755 = vpop.permute.xlu0 %754
    %v758 = vadd.f32 %v702, %v753
    %v759 = vadd.f32 %v703, %v755
    %s760 = sld [smem:[#allocation6 + $0x2f]]
    %v761 = vstv %s760
    %v762 = vmul.f32 %v761, %v612
    %v763 = vmul.f32 %v761, %v613
    %766 = vrot.lane.b32.xlu0 %v762, 127
    %v767 = vpop.permute.xlu0 %766
    %768 = vrot.lane.b32.xlu0 %v763, 127
    %v769 = vpop.permute.xlu0 %768
    %v772 = vadd.f32 %v716, %v767
    %v773 = vadd.f32 %v717, %v769
    %s774 = sld [smem:[#allocation6 + $0x4b]]
    %v775 = vstv %s774
    %v776 = vmul.f32 %v775, %v612
    %v777 = vmul.f32 %v775, %v613
    %780 = vrot.lane.b32.xlu0 %v776, 127
    %v781 = vpop.permute.xlu0 %780
    %782 = vrot.lane.b32.xlu0 %v777, 127
    %v783 = vpop.permute.xlu0 %782
    %v786 = vadd.f32 %v730, %v781
    %v787 = vadd.f32 %v731, %v783
    %s788 = sld [smem:[#allocation6 + $0x67]]
    %v789 = vstv %s788
    %v790 = vmul.f32 %v789, %v612
    %v791 = vmul.f32 %v789, %v613
    %794 = vrot.lane.b32.xlu0 %v790, 127
    %v795 = vpop.permute.xlu0 %794
    %796 = vrot.lane.b32.xlu0 %v791, 127
    %v797 = vpop.permute.xlu0 %796
    %v800 = vadd.f32 %v744, %v795
    %v801 = vadd.f32 %v745, %v797
    %s802 = sld [smem:[#allocation6 + $0x14]]
    %v803 = vstv %s802
    %v804 = vmul.f32 %v803, %v638
    %v805 = vmul.f32 %v803, %v639
    %808 = vrot.lane.b32.xlu0 %v804, 127
    %v809 = vpop.permute.xlu0 %808
    %810 = vrot.lane.b32.xlu0 %v805, 127
    %v811 = vpop.permute.xlu0 %810
    %v814 = vadd.f32 %v758, %v809
    %v815 = vadd.f32 %v759, %v811
    %s816 = sld [smem:[#allocation6 + $0x30]]
    %v817 = vstv %s816
    %v818 = vmul.f32 %v817, %v638
    %v819 = vmul.f32 %v817, %v639
    %822 = vrot.lane.b32.xlu0 %v818, 127
    %v823 = vpop.permute.xlu0 %822
    %824 = vrot.lane.b32.xlu0 %v819, 127
    %v825 = vpop.permute.xlu0 %824
    %v828 = vadd.f32 %v772, %v823
    %v829 = vadd.f32 %v773, %v825
    %s830 = sld [smem:[#allocation6 + $0x4c]]
    %v831 = vstv %s830
    %v832 = vmul.f32 %v831, %v638
    %v833 = vmul.f32 %v831, %v639
    %836 = vrot.lane.b32.xlu0 %v832, 127
    %v837 = vpop.permute.xlu0 %836
    %838 = vrot.lane.b32.xlu0 %v833, 127
    %v839 = vpop.permute.xlu0 %838
    %v842 = vadd.f32 %v786, %v837
    %v843 = vadd.f32 %v787, %v839
    %s844 = sld [smem:[#allocation6 + $0x68]]
    %v845 = vstv %s844
    %v846 = vmul.f32 %v845, %v638
    %v847 = vmul.f32 %v845, %v639
    %850 = vrot.lane.b32.xlu0 %v846, 127
    %v851 = vpop.permute.xlu0 %850
    %852 = vrot.lane.b32.xlu0 %v847, 127
    %v853 = vpop.permute.xlu0 %852
    %v856 = vadd.f32 %v800, %v851
    %v857 = vadd.f32 %v801, %v853
    %v858 = vld [vmem:[#allocation2 + $0xc] sm:$0x1]
    %v859 = vld [vmem:[#allocation2 + $0x1c] sm:$0x1]
    %s860 = sld [smem:[#allocation6 + $0x15]]
    %v861 = vstv %s860
    %v862 = vmul.f32 %v861, %v858
    %v863 = vmul.f32 %v861, %v859
    %v864 = vadd.f32 %v814, %v862
    %v865 = vadd.f32 %v815, %v863
    %s866 = sld [smem:[#allocation6 + $0x31]]
    %v867 = vstv %s866
    %v868 = vmul.f32 %v867, %v858
    %v869 = vmul.f32 %v867, %v859
    %v870 = vadd.f32 %v828, %v868
    %v871 = vadd.f32 %v829, %v869
    %s872 = sld [smem:[#allocation6 + $0x4d]]
    %v873 = vstv %s872
    %v874 = vmul.f32 %v873, %v858
    %v875 = vmul.f32 %v873, %v859
    %v876 = vadd.f32 %v842, %v874
    %v877 = vadd.f32 %v843, %v875
    %s878 = sld [smem:[#allocation6 + $0x69]]
    %v879 = vstv %s878
    %v880 = vmul.f32 %v879, %v858
    %v881 = vmul.f32 %v879, %v859
    %v882 = vadd.f32 %v856, %v880
    %v883 = vadd.f32 %v857, %v881
    %v884 = vld [vmem:[#allocation2 + $0xd] sm:$0x1]
    %v885 = vld [vmem:[#allocation2 + $0x1d] sm:$0x1]
    %s886 = sld [smem:[#allocation6 + $0x16]]
    %v887 = vstv %s886
    %v888 = vmul.f32 %v887, %v884
    %v889 = vmul.f32 %v887, %v885
    %v890 = vadd.f32 %v864, %v888
    %v891 = vadd.f32 %v865, %v889
    %s892 = sld [smem:[#allocation6 + $0x32]]
    %v893 = vstv %s892
    %v894 = vmul.f32 %v893, %v884
    %v895 = vmul.f32 %v893, %v885
    %v896 = vadd.f32 %v870, %v894
    %v897 = vadd.f32 %v871, %v895
    %s898 = sld [smem:[#allocation6 + $0x4e]]
    %v899 = vstv %s898
    %v900 = vmul.f32 %v899, %v884
    %v901 = vmul.f32 %v899, %v885
    %v902 = vadd.f32 %v876, %v900
    %v903 = vadd.f32 %v877, %v901
    %s904 = sld [smem:[#allocation6 + $0x6a]]
    %v905 = vstv %s904
    %v906 = vmul.f32 %v905, %v884
    %v907 = vmul.f32 %v905, %v885
    %v908 = vadd.f32 %v882, %v906
    %v909 = vadd.f32 %v883, %v907
    %v910 = vld [vmem:[#allocation2 + $0xe] sm:$0x1]
    %v911 = vld [vmem:[#allocation2 + $0x1e] sm:$0x1]
    %s912 = sld [smem:[#allocation6 + $0x17]]
    %v913 = vstv %s912
    %v914 = vmul.f32 %v913, %v910
    %v915 = vmul.f32 %v913, %v911
    %v916 = vadd.f32 %v890, %v914
    %v917 = vadd.f32 %v891, %v915
    %s918 = sld [smem:[#allocation6 + $0x33]]
    %v919 = vstv %s918
    %v920 = vmul.f32 %v919, %v910
    %v921 = vmul.f32 %v919, %v911
    %v922 = vadd.f32 %v896, %v920
    %v923 = vadd.f32 %v897, %v921
    %s924 = sld [smem:[#allocation6 + $0x4f]]
    %v925 = vstv %s924
    %v926 = vmul.f32 %v925, %v910
    %v927 = vmul.f32 %v925, %v911
    %v928 = vadd.f32 %v902, %v926
    %v929 = vadd.f32 %v903, %v927
    %s930 = sld [smem:[#allocation6 + $0x6b]]
    %v931 = vstv %s930
    %v932 = vmul.f32 %v931, %v910
    %v933 = vmul.f32 %v931, %v911
    %v934 = vadd.f32 %v908, %v932
    %v935 = vadd.f32 %v909, %v933
    %v936 = vld [vmem:[#allocation2 + $0xf] sm:$0x1]
    %v937 = vld [vmem:[#allocation2 + $0x1f] sm:$0x1]
    %s938 = sld [smem:[#allocation6 + $0x18]]
    %v939 = vstv %s938
    %v940 = vmul.f32 %v939, %v936
    %v941 = vmul.f32 %v939, %v937
    %v942 = vadd.f32 %v916, %v940
    %v943 = vadd.f32 %v917, %v941
    %s944 = sld [smem:[#allocation6 + $0x34]]
    %v945 = vstv %s944
    %v946 = vmul.f32 %v945, %v936
    %v947 = vmul.f32 %v945, %v937
    %v948 = vadd.f32 %v922, %v946
    %v949 = vadd.f32 %v923, %v947
    %s950 = sld [smem:[#allocation6 + $0x50]]
    %v951 = vstv %s950
    %v952 = vmul.f32 %v951, %v936
    %v953 = vmul.f32 %v951, %v937
    %v954 = vadd.f32 %v928, %v952
    %v955 = vadd.f32 %v929, %v953
    %s956 = sld [smem:[#allocation6 + $0x6c]]
    %v957 = vstv %s956
    %v958 = vmul.f32 %v957, %v936
    %v959 = vmul.f32 %v957, %v937
    %v960 = vadd.f32 %v934, %v958
    %v961 = vadd.f32 %v935, %v959
    %s962 = sld [smem:[#allocation6 + $0x19]]
    %v963 = vstv %s962
    %v964 = vmul.f32 %v963, %v858
    %v965 = vmul.f32 %v963, %v859
    %968 = vrot.lane.b32.xlu0 %v964, 127
    %v969 = vpop.permute.xlu0 %968
    %970 = vrot.lane.b32.xlu0 %v965, 127
    %v971 = vpop.permute.xlu0 %970
    %v974 = vadd.f32 %v942, %v969
    %v975 = vadd.f32 %v943, %v971
    %s976 = sld [smem:[#allocation6 + $0x35]]
    %v977 = vstv %s976
    %v978 = vmul.f32 %v977, %v858
    %v979 = vmul.f32 %v977, %v859
    %982 = vrot.lane.b32.xlu0 %v978, 127
    %v983 = vpop.permute.xlu0 %982
    %984 = vrot.lane.b32.xlu0 %v979, 127
    %v985 = vpop.permute.xlu0 %984
    %v988 = vadd.f32 %v948, %v983
    %v989 = vadd.f32 %v949, %v985
    %s990 = sld [smem:[#allocation6 + $0x51]]
    %v991 = vstv %s990
    %v992 = vmul.f32 %v991, %v858
    %v993 = vmul.f32 %v991, %v859
    %996 = vrot.lane.b32.xlu0 %v992, 127
    %v997 = vpop.permute.xlu0 %996
    %998 = vrot.lane.b32.xlu0 %v993, 127
    %v999 = vpop.permute.xlu0 %998
    %v1002 = vadd.f32 %v954, %v997
    %v1003 = vadd.f32 %v955, %v999
    %s1004 = sld [smem:[#allocation6 + $0x6d]]
    %v1005 = vstv %s1004
    %v1006 = vmul.f32 %v1005, %v858
    %v1007 = vmul.f32 %v1005, %v859
    %1010 = vrot.lane.b32.xlu0 %v1006, 127
    %v1011 = vpop.permute.xlu0 %1010
    %1012 = vrot.lane.b32.xlu0 %v1007, 127
    %v1013 = vpop.permute.xlu0 %1012
    %v1016 = vadd.f32 %v960, %v1011
    %v1017 = vadd.f32 %v961, %v1013
    %s1018 = sld [smem:[#allocation6 + $0x1a]]
    %v1019 = vstv %s1018
    %v1020 = vmul.f32 %v1019, %v884
    %v1021 = vmul.f32 %v1019, %v885
    %1024 = vrot.lane.b32.xlu0 %v1020, 127
    %v1025 = vpop.permute.xlu0 %1024
    %1026 = vrot.lane.b32.xlu0 %v1021, 127
    %v1027 = vpop.permute.xlu0 %1026
    %v1030 = vadd.f32 %v974, %v1025
    %v1031 = vadd.f32 %v975, %v1027
    %s1032 = sld [smem:[#allocation6 + $0x36]]
    %v1033 = vstv %s1032
    %v1034 = vmul.f32 %v1033, %v884
    %v1035 = vmul.f32 %v1033, %v885
    %1038 = vrot.lane.b32.xlu0 %v1034, 127
    %v1039 = vpop.permute.xlu0 %1038
    %1040 = vrot.lane.b32.xlu0 %v1035, 127
    %v1041 = vpop.permute.xlu0 %1040
    %v1044 = vadd.f32 %v988, %v1039
    %v1045 = vadd.f32 %v989, %v1041
    %s1046 = sld [smem:[#allocation6 + $0x52]]
    %v1047 = vstv %s1046
    %v1048 = vmul.f32 %v1047, %v884
    %v1049 = vmul.f32 %v1047, %v885
    %1052 = vrot.lane.b32.xlu0 %v1048, 127
    %v1053 = vpop.permute.xlu0 %1052
    %1054 = vrot.lane.b32.xlu0 %v1049, 127
    %v1055 = vpop.permute.xlu0 %1054
    %v1058 = vadd.f32 %v1002, %v1053
    %v1059 = vadd.f32 %v1003, %v1055
    %s1060 = sld [smem:[#allocation6 + $0x6e]]
    %v1061 = vstv %s1060
    %v1062 = vmul.f32 %v1061, %v884
    %v1063 = vmul.f32 %v1061, %v885
    %1066 = vrot.lane.b32.xlu0 %v1062, 127
    %v1067 = vpop.permute.xlu0 %1066
    %1068 = vrot.lane.b32.xlu0 %v1063, 127
    %v1069 = vpop.permute.xlu0 %1068
    %v1072 = vadd.f32 %v1016, %v1067
    %v1073 = vadd.f32 %v1017, %v1069
    %s1074 = sld [smem:[#allocation6 + $0x1b]]
    %v1075 = vstv %s1074
    %v1076 = vmul.f32 %v1075, %v910
    %v1077 = vmul.f32 %v1075, %v911
    %1080 = vrot.lane.b32.xlu0 %v1076, 127
    %v1081 = vpop.permute.xlu0 %1080
    %1082 = vrot.lane.b32.xlu0 %v1077, 127
    %v1083 = vpop.permute.xlu0 %1082
    %v1086 = vadd.f32 %v1030, %v1081
    %v1087 = vadd.f32 %v1031, %v1083
    %s1088 = sld [smem:[#allocation6 + $0x37]]
    %v1089 = vstv %s1088
    %v1090 = vmul.f32 %v1089, %v910
    %v1091 = vmul.f32 %v1089, %v911
    %1094 = vrot.lane.b32.xlu0 %v1090, 127
    %v1095 = vpop.permute.xlu0 %1094
    %1096 = vrot.lane.b32.xlu0 %v1091, 127
    %v1097 = vpop.permute.xlu0 %1096
    %v1100 = vadd.f32 %v1044, %v1095
    %v1101 = vadd.f32 %v1045, %v1097
    %s1102 = sld [smem:[#allocation6 + $0x53]]
    %v1103 = vstv %s1102
    %v1104 = vmul.f32 %v1103, %v910
    %v1105 = vmul.f32 %v1103, %v911
    %1108 = vrot.lane.b32.xlu0 %v1104, 127
    %v1109 = vpop.permute.xlu0 %1108
    %1110 = vrot.lane.b32.xlu0 %v1105, 127
    %v1111 = vpop.permute.xlu0 %1110
    %v1114 = vadd.f32 %v1058, %v1109
    %v1115 = vadd.f32 %v1059, %v1111
    %s1116 = sld [smem:[#allocation6 + $0x6f]]
    %v1117 = vstv %s1116
    %v1118 = vmul.f32 %v1117, %v910
    %v1119 = vmul.f32 %v1117, %v911
    %1122 = vrot.lane.b32.xlu0 %v1118, 127
    %v1123 = vpop.permute.xlu0 %1122
    %1124 = vrot.lane.b32.xlu0 %v1119, 127
    %v1125 = vpop.permute.xlu0 %1124
    %v1128 = vadd.f32 %v1072, %v1123
    %v1129 = vadd.f32 %v1073, %v1125
    %v1132 = vrot.slane %v1100, 7
    %v1133 = vrot.slane %v1101, 7
    %v1138 = vrot.slane %v1114, 6
    %v1139 = vrot.slane %v1115, 6
    %v1144 = vrot.slane %v1128, 5
    %v1145 = vrot.slane %v1129, 5
    %vm1148 = vcmask 1040384
    %v1149 = vsel %vm1148, %v1086, %v1132
    %v1150 = vsel %vm1148, %v1087, %v1133
    %vm1151 = vcmask 1041408
    %v1152 = vsel %vm1151, %v1149, %v1138
    %v1153 = vsel %vm1151, %v1150, %v1139
    %vm1154 = vcmask 1042432
    %v1155 = vsel %vm1154, %v1152, %v1144
    %v1156 = vsel %vm1154, %v1153, %v1145
    %v1157 = vpack.c.bf16 %v1155, %v1155
    %v1158 = vpack.c.bf16 %v1156, %v1156
    %vm1159 = vcmask 123904
    %1160 = vst.msk [vmem:[#allocation7] sm:$0x3] %vm1159, %v1157
    %1161 = vst.msk [vmem:[#allocation7 + $0x2] sm:$0x3] %vm1159, %v1158
    %vm1162 = vcmask 125952
    %v1163 = vsel %vm1162, %v1155, 0.0
    %v1164 = vsel %vm1162, %v1156, 0.0
    %v1165 = vadd.f32 %v1163, %v1164
    %1166 = vadd.xlane.f32.xlu0 %v1165
    %v1167 = vpop.xlane.xlu0 %1166
    %v1168 = vmul.f32 %v1167, 0.03125
    %v1169 = vsub.f32 %v1155, %v1168
    %v1170 = vsub.f32 %v1156, %v1168
    %v1171 = vmul.f32 %v1169, %v1169
    %v1172 = vmul.f32 %v1170, %v1170
    %v1173 = vsel %vm1162, %v1171, 0.0
    %v1174 = vsel %vm1162, %v1172, 0.0
    %v1175 = vadd.f32 %v1173, %v1174
    %1176 = vadd.xlane.f32.xlu0 %v1175
    %v1177 = vpop.xlane.xlu0 %1176
    %v1179 = vlaneseq
    %v1180 = vshrl.u32 %v1179, 7
    %v1181 = vsub.s32 0, %v1180
    %v1182 = vrot.slane %v1167, %v1181
    %v1183 = vlaneseq
    %v1184 = vshrl.u32 %v1183, 7
    %v1185 = vsub.s32 1, %v1184
    %v1186 = vrot.slane %v1167, %v1185
    %v1187 = vlaneseq
    %v1188 = vshrl.u32 %v1187, 7
    %v1189 = vsub.s32 2, %v1188
    %v1190 = vrot.slane %v1167, %v1189
    %v1191 = vlaneseq
    %v1192 = vshrl.u32 %v1191, 7
    %v1193 = vsub.s32 3, %v1192
    %v1194 = vrot.slane %v1167, %v1193
    %v1195 = vcombine.low %v1182, %v1186
    %v1196 = vcombine.low %v1190, %v1194
    %v1198 = vunpack.c.l.s4 1966171168
    %v1199 = vunpack.c.0.s8 %v1198
    %v1200 = vlaneseq
    %v1201 = vshrl.u32 %v1200, 7
    %v1202 = vsub.s32 %v1199, %v1201
    %v1203 = vrot.slane %v1195, %v1202
    %v1205 = vunpack.c.l.s4 1966171168
    %v1206 = vunpack.c.0.s8 %v1205
    %v1207 = vlaneseq
    %v1208 = vshrl.u32 %v1207, 7
    %v1209 = vsub.s32 %v1206, %v1208
    %v1210 = vrot.slane %v1196, %v1209
    %v1211 = vcombine.low %v1203, %v1210
    %v1213 = vunpack.c.l.s4 1966171168
    %v1214 = vunpack.c.0.s8 %v1213
    %v1215 = vlaneseq
    %v1216 = vshrl.u32 %v1215, 7
    %v1217 = vsub.s32 %v1214, %v1216
    %v1218 = vrot.slane %v1211, %v1217
    %1219 = vset.pattern.permute.xlu0 0
    %1220 = vperm.xlu0 %1219, %v1218
    %v1221 = vpop.permute.xlu0 %1220
    %v1222 = vlaneseq
    %v1223 = vand.u32 %v1222, 127
    %v1224 = vlaneseq
    %v1225 = vshrl.u32 %v1224, 7
    %v1226 = vsub.s32 %v1223, %v1225
    %v1227 = vrot.slane %v1221, %v1226
    %v1229 = vunpack.c.l.s4 1966171168
    %v1230 = vunpack.c.0.s8 %v1229
    %v1231 = vlaneseq
    %v1232 = vshrl.u32 %v1231, 7
    %v1233 = vsub.s32 %v1230, %v1232
    %v1234 = vrot.slane %v1227, %v1233
    %v1236 = vunpack.c.l.s4 1966171168
    %v1237 = vunpack.c.0.s8 %v1236
    %v1238 = vlaneseq
    %v1239 = vshrl.u32 %v1238, 7
    %v1240 = vsub.s32 %v1237, %v1239
    %v1241 = vrot.slane %v1234, %v1240
    %v1244 = vlaneseq
    %v1245 = vshrl.u32 %v1244, 7
    %v1246 = vsub.s32 0, %v1245
    %v1247 = vrot.slane %v1177, %v1246
    %v1248 = vlaneseq
    %v1249 = vshrl.u32 %v1248, 7
    %v1250 = vsub.s32 1, %v1249
    %v1251 = vrot.slane %v1177, %v1250
    %v1252 = vlaneseq
    %v1253 = vshrl.u32 %v1252, 7
    %v1254 = vsub.s32 2, %v1253
    %v1255 = vrot.slane %v1177, %v1254
    %v1256 = vlaneseq
    %v1257 = vshrl.u32 %v1256, 7
    %v1258 = vsub.s32 3, %v1257
    %v1259 = vrot.slane %v1177, %v1258
    %v1260 = vcombine.low %v1247, %v1251
    %v1261 = vcombine.low %v1255, %v1259
    %v1263 = vunpack.c.l.s4 1966171168
    %v1264 = vunpack.c.0.s8 %v1263
    %v1265 = vlaneseq
    %v1266 = vshrl.u32 %v1265, 7
    %v1267 = vsub.s32 %v1264, %v1266
    %v1268 = vrot.slane %v1260, %v1267
    %v1270 = vunpack.c.l.s4 1966171168
    %v1271 = vunpack.c.0.s8 %v1270
    %v1272 = vlaneseq
    %v1273 = vshrl.u32 %v1272, 7
    %v1274 = vsub.s32 %v1271, %v1273
    %v1275 = vrot.slane %v1261, %v1274
    %v1276 = vcombine.low %v1268, %v1275
    %v1278 = vunpack.c.l.s4 1966171168
    %v1279 = vunpack.c.0.s8 %v1278
    %v1280 = vlaneseq
    %v1281 = vshrl.u32 %v1280, 7
    %v1282 = vsub.s32 %v1279, %v1281
    %v1283 = vrot.slane %v1276, %v1282
    %1284 = vset.pattern.permute.xlu0 0
    %1285 = vperm.xlu0 %1284, %v1283
    %v1286 = vpop.permute.xlu0 %1285
    %v1287 = vadd.s32 %v1223, 4294967292
    %v1288 = vlaneseq
    %v1289 = vshrl.u32 %v1288, 7
    %v1290 = vsub.s32 %v1287, %v1289
    %v1291 = vrot.slane %v1286, %v1290
    %v1293 = vunpack.c.l.s4 1966171168
    %v1294 = vunpack.c.0.s8 %v1293
    %v1295 = vlaneseq
    %v1296 = vshrl.u32 %v1295, 7
    %v1297 = vsub.s32 %v1294, %v1296
    %v1298 = vrot.slane %v1291, %v1297
    %v1300 = vunpack.c.l.s4 1966171168
    %v1301 = vunpack.c.0.s8 %v1300
    %v1302 = vlaneseq
    %v1303 = vshrl.u32 %v1302, 7
    %v1304 = vsub.s32 %v1301, %v1303
    %v1305 = vrot.slane %v1298, %v1304
    %v1307 = vlaneseq
    %vm1308 = vcmp.ge.s32.totalorder %v1307, 0
    %vm1309 = vcmp.lt.s32.totalorder %v1307, 4
    %vm1310 = vmand %vm1308, %vm1309
    %v1311 = vsel %vm1310, %v1241, %v1305
    %vm1312 = vcmask 57344
    %1313 = vst.msk [vmem:[#allocation8] sm:$0x1] %vm1312, %v1311
    // Predicated region
    $region18: #{tpu_custom_call.1} parent=1 // pred_check
      _
    $region19: #{tpu_custom_call.1} parent=1 // pred_check_branch
      %1315 = sbr.rel (0) target = $region21
    $region20: #{tpu_custom_call.1} parent=1 // pred_region
      %s1317 = ssub.s32 64, 64
      %1318 = vsyncadd [#allocation4], %s1317
      %s1319 = sshll.u32 [#allocation7], 4
      %s1320 = int_to_ptr.vmem [resolvable:$true] %s1319
      %1325 = dma.vmem_to_hbm [thread:$0]  %s1320, 64, %s2, [#allocation4], 32, 32, 2
    $region21: #{tpu_custom_call.1} parent=1 // pred_fallthru
      _
    // Predicated region
    $region22: #{tpu_custom_call.1} parent=1 // pred_check
      _
    $region23: #{tpu_custom_call.1} parent=1 // pred_check_branch
      %1327 = sbr.rel (0) target = $region25
    $region24: #{tpu_custom_call.1} parent=1 // pred_region
      %s1329 = ssub.s32 16, 16
      %1330 = vsyncadd [#allocation9], %s1329
      %s1332 = sshll.u32 [#allocation8], 4
      %s1333 = int_to_ptr.vmem [resolvable:$true] %s1332
      %1335 = dma.vmem_to_hbm [thread:$0]  %s1333, 16, %s3, [#allocation9]
    $region25: #{tpu_custom_call.1} parent=1 // pred_fallthru
      _
    // Predicated region
    $region26: #{tpu_custom_call.1} parent=1 // pred_check
      _
    $region27: #{tpu_custom_call.1} parent=1 // pred_check_branch
      %1337 = sbr.rel (0) target = $region29
    $region28: #{tpu_custom_call.1} parent=1 // pred_region
      %1338 = dma.done [#allocation4], 64
    $region29: #{tpu_custom_call.1} parent=1 // pred_fallthru
      _
    // Predicated region
    $region30: #{tpu_custom_call.1} parent=1 // pred_check
      _
    $region31: #{tpu_custom_call.1} parent=1 // pred_check_branch
      %1340 = sbr.rel (0) target = $region33
    $region32: #{tpu_custom_call.1} parent=1 // pred_region
      %1341 = dma.done [#allocation9], 16
    $region33: #{tpu_custom_call.1} parent=1 // pred_fallthru
      _
    %1342 = vsyncpa [#allocation3], 1
    %1343 = vsyncpa [#allocation4], 1
    %1344 = vsyncpa [#allocation9], 1
    %1345 = vsyncpa [#allocation5], 1

</llo_original>
